<compile_context>
chip_gen: v5e
topology: v5e:2x2
jax: 0.10.0
libtpu: 0.0.40
codegen_flags: <defaults>
</compile_context>

<pallas_src>
import math

import jax
import jax.numpy as jnp
from jax import lax
from jax.experimental import pallas as pl
from jax.experimental.pallas import tpu as pltpu

NUM_HEADS = 8
LN_EPS = 1e-5
_INV_SQRT2 = 0.7071067811865476

# Row indices of the packed (10, D) per-channel parameter slab.
_BP, _N1W, _N1B, _BO, _N2W, _N2B, _B2, _ONW, _ONB, _GATE = range(10)


def _layer_norm(x, w, b):
    # x: (R, C); w, b: (1, C)
    mu = jnp.mean(x, axis=-1, keepdims=True)
    xc = x - mu
    var = jnp.mean(xc * xc, axis=-1, keepdims=True)
    return xc * lax.rsqrt(var + LN_EPS) * w + b


def _gelu_exact(x):
    # PyTorch nn.GELU() default = exact erf formulation.
    return 0.5 * x * (1.0 + lax.erf(x * _INV_SQRT2))


def _bf16_dot(a, b_bf16):
    # bf16 MXU inputs, f32 accumulation.
    return jnp.dot(a.astype(jnp.bfloat16), b_bf16,
                   preferred_element_type=jnp.float32)


def bridge_kernel(x_ref, in_vecs_ref, wp_ref, vecs_ref,
                  wqkv_ref, bqkv_ref, wo_ref, w1_ref, b1_ref, w2_ref,
                  o_ref,
                  qkv_scr, heads_scr, h_scr, ident_scr):
    TB, N, Cin = x_ref.shape
    D = wp_ref.shape[1]
    hd = D // NUM_HEADS
    R = TB * N

    vecs = vecs_ref[...]                                    # (10, D) f32

    def vrow(i):
        return vecs[i:i + 1, :]                             # (1, D)

    # Flatten the batch block: all row-wise ops run on (TB*N, C) at once.
    x = x_ref[...].reshape(R, Cin)

    # ---- input LayerNorm + input projection ----
    xn = _layer_norm(x, in_vecs_ref[0:1, :], in_vecs_ref[1:2, :])
    h = _bf16_dot(xn, wp_ref[...]) + vrow(_BP)              # (R, D) f32
    h_scr[...] = h                                          # running h (scratch)
    ident_scr[...] = h                                      # main_identity (scratch)

    # ---- bridge layer (n_layers = 1): fused-QKV self-attention ----
    hn = _layer_norm(h, vrow(_N1W), vrow(_N1B))
    # 1/sqrt(hd) is folded into the Q columns of wqkv/bqkv on the host.
    qkv_scr[...] = (_bf16_dot(hn, wqkv_ref[...])
                    + bqkv_ref[...]).astype(jnp.bfloat16)   # (R, 3D) bf16, staged once

    wo = wo_ref[...]                                        # (D, D) bf16
    bo = vrow(_BO)                                          # (1, D) f32

    def attend(b, carry):
        r0 = pl.multiple_of(b * N, N)
        qkv_b = qkv_scr[pl.ds(r0, N), :]                    # (N, 3D) bf16
        for hh in range(NUM_HEADS):                         # static unroll: 8 heads
            lo = hh * hd
            qs = qkv_b[:, lo:lo + hd]
            ks = qkv_b[:, D + lo:D + lo + hd]
            vs = qkv_b[:, 2 * D + lo:2 * D + lo + hd]
            # scores = qs @ ks.T  (contract last dims, no explicit transpose)
            s = lax.dot_general(qs, ks, (((1,), (1,)), ((), ())),
                                preferred_element_type=jnp.float32)       # (N, N)
            s = s - jnp.max(s, axis=-1, keepdims=True)
            p = jnp.exp(s)
            p = p * pl.reciprocal(jnp.sum(p, axis=-1, keepdims=True), approx=True)
            head = jnp.dot(p.astype(jnp.bfloat16), vs,
                           preferred_element_type=jnp.float32)            # (N, hd)
            heads_scr[:, lo:lo + hd] = head.astype(jnp.bfloat16)
        # One full-depth (K = D) output-projection matmul per batch element.
        attn = jnp.dot(heads_scr[...], wo, preferred_element_type=jnp.float32)
        # Fold the residual add directly into the running h (no extra round trip).
        h_scr[pl.ds(r0, N), :] = h_scr[pl.ds(r0, N), :] + attn + bo
        return carry

    lax.fori_loop(0, TB, attend, 0)

    # ---- feed-forward ----
    h = h_scr[...]
    hn2 = _layer_norm(h, vrow(_N2W), vrow(_N2B))
    f = _gelu_exact(_bf16_dot(hn2, w1_ref[...]) + b1_ref[...])   # (R, 2D)
    h = h + _bf16_dot(f, w2_ref[...]) + vrow(_B2)

    # ---- gated long residual + output norm ----
    h = h + vrow(_GATE) * ident_scr[...]                    # _GATE row = sigmoid(gate)
    out = _layer_norm(h, vrow(_ONW), vrow(_ONB))
    o_ref[...] = out.reshape(TB, N, D).astype(o_ref.dtype)


def _vmem_capacity_bytes():
    try:
        return int(pltpu.get_tpu_info().vmem_capacity_bytes)
    except Exception:                                        # pragma: no cover
        return 64 * 1024 * 1024                              # v7x-safe fallback


def _choose_block_b(B, N, rows_cap, target_rows=512):
    """Batch elements per grid step: fold rows toward ~512, capped by VMEM."""
    tb_cap = max(1, min(B,
                        max(1, rows_cap // max(N, 1)),
                        max(1, target_rows // max(N, 1))))
    # Largest divisor of B that fits the cap (falls back to 1 for awkward B —
    # a perf cliff, not a correctness issue).
    for cand in range(tb_cap, 0, -1):
        if B % cand == 0:
            return cand
    return 1


@jax.jit
def multihead_attention_bridge(x, params):
    B, N, Cin = x.shape
    D = params["wp"].shape[1]
    assert D % NUM_HEADS == 0
    hd = D // NUM_HEADS
    scale = 1.0 / math.sqrt(hd)

    f32, bf16 = jnp.float32, jnp.bfloat16

    # ---- fuse / pack parameters on the wrapper side ----
    # Fold the softmax scale into the Q columns so the kernel never rescales.
    wqkv = jnp.concatenate([params["wq"] * scale, params["wk"], params["wv"]],
                           axis=1).astype(bf16)
    bqkv = jnp.concatenate([params["bq"] * scale, params["bk"], params["bv"]],
                           axis=1).astype(f32)
    in_vecs = jnp.concatenate([params["in_norm_w"], params["in_norm_b"]],
                              axis=0).astype(f32)
    gate_row = jnp.full((1, D), jax.nn.sigmoid(params["gate"][0, 0]), f32)
    vecs = jnp.concatenate([
        params["bp"], params["n1_w"], params["n1_b"], params["bo"],
        params["n2_w"], params["n2_b"], params["b2"],
        params["on_w"], params["on_b"], gate_row], axis=0).astype(f32)     # (10, D)

    wp = params["wp"].astype(bf16)
    wo = params["wo"].astype(bf16)
    w1 = params["w1"].astype(bf16)
    w2 = params["w2"].astype(bf16)
    b1 = params["b1"].astype(f32)

    weights = [in_vecs, wp, vecs, wqkv, bqkv, wo, w1, b1, w2]
    weight_bytes = sum(int(w.size) * w.dtype.itemsize for w in weights)

    # ---- VMEM-aware block size ----
    phys_vmem = _vmem_capacity_bytes()
    per_row = (2 * (Cin + D) * 4      # x / o blocks, double-buffered
               + 3 * D * 2            # bf16 qkv scratch
               + 2 * D * 4            # running h + identity f32 scratch
               + 8 * D * 4)           # transient f32 slabs (qkv f32, FFN hidden, LN temps)
    budget = int(0.80 * phys_vmem) - weight_bytes - (8 << 20)
    rows_cap = max(N, budget // max(per_row, 1))
    TB = _choose_block_b(B, N, rows_cap)
    grid = (B // TB,)
    R = TB * N

    x_spec = pl.BlockSpec((TB, N, Cin), lambda b: (b, 0, 0))
    o_spec = pl.BlockSpec((TB, N, D), lambda b: (b, 0, 0))
    # Grid-invariant weights: single-buffer (default double-buffering just
    # doubles the resident weight footprint for nothing).
    w_specs = [pl.BlockSpec(tuple(w.shape), lambda b: (0, 0),
                            pipeline_mode=pl.Buffered(1)) for w in weights]

    # Honest VMEM budget: weights x1, blocks x2, scratch + transients + slack,
    # capped below physical capacity so Mosaic keeps headroom for its own scratch.
    need = weight_bytes + R * per_row + (6 << 20)
    vmem_limit = int(max(16 << 20, min(need, int(0.85 * phys_vmem))))

    return pl.pallas_call(
        bridge_kernel,
        out_shape=jax.ShapeDtypeStruct((B, N, D), jnp.float32),
        grid_spec=pltpu.PrefetchScalarGridSpec(
            num_scalar_prefetch=0,
            grid=grid,
            in_specs=[x_spec] + w_specs,
            out_specs=o_spec,
            scratch_shapes=[
                pltpu.VMEM((R, 3 * D), jnp.bfloat16),   # staged fused qkv (bias+scale applied)
                pltpu.VMEM((N, D), jnp.bfloat16),        # per-batch staged head outputs
                pltpu.VMEM((R, D), jnp.float32),         # running h
                pltpu.VMEM((R, D), jnp.float32),         # main_identity
            ],
        ),
        compiler_params=pltpu.CompilerParams(
            dimension_semantics=("parallel",),
            vmem_limit_bytes=vmem_limit),
    )(x, *weights)


# ---------------------------------------------------------------------------
# Pure-JAX reference (module math).  matmul_dtype=bfloat16 mirrors the kernel's
# bf16 MXU inputs (projections AND attention matmuls); float32 is exact math.
# ---------------------------------------------------------------------------
def reference(x, params, matmul_dtype=jnp.float32):
    md = matmul_dtype

    def mm(a, b):
        return jnp.dot(a.astype(md), b.astype(md), preferred_element_type=jnp.float32)

    def ln(v, w, b):
        mu = jnp.mean(v, axis=-1, keepdims=True)
        vc = v - mu
        var = jnp.mean(vc * vc, axis=-1, keepdims=True)
        return vc * lax.rsqrt(var + LN_EPS) * w + b

    B, N, _ = x.shape
    D = params["wp"].shape[1]
    hd = D // NUM_HEADS
    scale = 1.0 / math.sqrt(hd)

    xn = ln(x, params["in_norm_w"], params["in_norm_b"])
    h = mm(xn, params["wp"]) + params["bp"]
    ident = h

    hn = ln(h, params["n1_w"], params["n1_b"])
    q = (mm(hn, params["wq"]) + params["bq"]).reshape(B, N, NUM_HEADS, hd)
    k = (mm(hn, params["wk"]) + params["bk"]).reshape(B, N, NUM_HEADS, hd)
    v = (mm(hn, params["wv"]) + params["bv"]).reshape(B, N, NUM_HEADS, hd)
    scores = jnp.einsum("bnhd,bmhd->bhnm", (q * scale).astype(md), k.astype(md),
                        preferred_element_type=jnp.float32)
    p = jax.nn.softmax(scores, axis=-1)
    attn = jnp.einsum("bhnm,bmhd->bnhd", p.astype(md), v.astype(md),
                      preferred_element_type=jnp.float32).reshape(B, N, D)
    attn = mm(attn, params["wo"]) + params["bo"]
    h = h + attn

    hn2 = ln(h, params["n2_w"], params["n2_b"])
    f = mm(hn2, params["w1"]) + params["b1"]
    f = 0.5 * f * (1.0 + lax.erf(f * _INV_SQRT2))
    f = mm(f, params["w2"]) + params["b2"]
    h = h + f

    h = h + jax.nn.sigmoid(params["gate"]) * ident
    return ln(h, params["on_w"], params["on_b"])


def init_params(key, in_dim, bridge_dim):
    D, D2 = bridge_dim, 2 * bridge_dim
    ks = jax.random.split(key, 14)

    def w(k, shape, s=0.05):
        return jax.random.normal(k, shape, jnp.float32) * s

    return {
        # input LayerNorm (PyTorch init: ones / zeros)
        "in_norm_w": jnp.ones((1, in_dim), jnp.float32),
        "in_norm_b": jnp.zeros((1, in_dim), jnp.float32),
        # input projection (stored as [in, out] so the kernel does x @ W)
        "wp": w(ks[0], (in_dim, D)), "bp": w(ks[1], (1, D), 0.01),
        # layer norms of the bridge layer
        "n1_w": jnp.ones((1, D), jnp.float32), "n1_b": jnp.zeros((1, D), jnp.float32),
        "n2_w": jnp.ones((1, D), jnp.float32), "n2_b": jnp.zeros((1, D), jnp.float32),
        # MHA in_proj split into q/k/v + out_proj
        "wq": w(ks[2], (D, D)), "bq": w(ks[3], (1, D), 0.01),
        "wk": w(ks[4], (D, D)), "bk": w(ks[5], (1, D), 0.01),
        "wv": w(ks[6], (D, D)), "bv": w(ks[7], (1, D), 0.01),
        "wo": w(ks[8], (D, D)), "bo": w(ks[9], (1, D), 0.01),
        # feed-forward
        "w1": w(ks[10], (D, D2)), "b1": w(ks[11], (1, D2), 0.01),
        "w2": w(ks[12], (D2, D)), "b2": w(ks[13], (1, D), 0.01),
        # output norm + gate
        "on_w": jnp.ones((1, D), jnp.float32), "on_b": jnp.zeros((1, D), jnp.float32),
        "gate": jnp.full((1, 1), 0.5, jnp.float32),
    }


if __name__ == "__main__":
    B, N, IN_DIM, BRIDGE_DIM = 2, 8, 32, 32   # bridge_dim divisible by 8 heads
    key = jax.random.PRNGKey(0)
    kx, kp = jax.random.split(key)
    params = init_params(kp, IN_DIM, BRIDGE_DIM)
    x = jax.random.normal(kx, (B, N, IN_DIM), jnp.float32)

    out = jax.block_until_ready(multihead_attention_bridge(x, params))
    assert out.shape == (B, N, BRIDGE_DIM), out.shape

    # Tight check vs. a reference that mirrors the kernel's bf16 matmul inputs
    # (projections and attention matmuls both in bf16).
    ref_bf16 = reference(x, params, matmul_dtype=jnp.bfloat16)
    err_bf16 = float(jnp.max(jnp.abs(out - ref_bf16)))
    assert err_bf16 < 2e-2, f"mismatch vs bf16-mirror reference: {err_bf16}"

    # Sanity check vs. the exact float32 module math (bf16 rounding tolerance).
    ref_f32 = reference(x, params, matmul_dtype=jnp.float32)
    err_f32 = float(jnp.max(jnp.abs(out - ref_f32)))
    assert err_f32 < 1e-1, f"mismatch vs f32 reference: {err_f32}"

    print("KERNEL_OK")
</pallas_src>

<mosaic_0001>
module attributes {stable_mosaic.version = 11 : i64} {
  func.func @bridge_kernel(%arg0: i32, %arg1: memref<2x8x32xf32, #tpu.memory_space<vmem>>, %arg2: memref<2x32xf32, #tpu.memory_space<vmem>>, %arg3: memref<32x32xbf16, #tpu.memory_space<vmem>>, %arg4: memref<10x32xf32, #tpu.memory_space<vmem>>, %arg5: memref<32x96xbf16, #tpu.memory_space<vmem>>, %arg6: memref<1x96xf32, #tpu.memory_space<vmem>>, %arg7: memref<32x32xbf16, #tpu.memory_space<vmem>>, %arg8: memref<32x64xbf16, #tpu.memory_space<vmem>>, %arg9: memref<1x64xf32, #tpu.memory_space<vmem>>, %arg10: memref<64x32xbf16, #tpu.memory_space<vmem>>, %arg11: memref<2x8x32xf32, #tpu.memory_space<vmem>>, %arg12: memref<16x96xbf16, #tpu.memory_space<vmem>>, %arg13: memref<8x32xbf16, #tpu.memory_space<vmem>>, %arg14: memref<16x32xf32, #tpu.memory_space<vmem>>, %arg15: memref<16x32xf32, #tpu.memory_space<vmem>>) attributes {dimension_semantics = [#tpu.dimension_semantics<parallel>], iteration_bounds = array<i64: 1>, scalar_prefetch = 0 : i64, scratch_operands = 4 : i64, tpu.core_type = #tpu.core_type<tc>, window_params = [{transform_indices = @transform_0, window_bounds = array<i64: 2, 8, 32>}, {pipeline_mode = #tpu.pipeline_mode<synchronous>, transform_indices = @transform_1, window_bounds = array<i64: 2, 32>}, {pipeline_mode = #tpu.pipeline_mode<synchronous>, transform_indices = @transform_2, window_bounds = array<i64: 32, 32>}, {pipeline_mode = #tpu.pipeline_mode<synchronous>, transform_indices = @transform_3, window_bounds = array<i64: 10, 32>}, {pipeline_mode = #tpu.pipeline_mode<synchronous>, transform_indices = @transform_4, window_bounds = array<i64: 32, 96>}, {pipeline_mode = #tpu.pipeline_mode<synchronous>, transform_indices = @transform_5, window_bounds = array<i64: 1, 96>}, {pipeline_mode = #tpu.pipeline_mode<synchronous>, transform_indices = @transform_6, window_bounds = array<i64: 32, 32>}, {pipeline_mode = #tpu.pipeline_mode<synchronous>, transform_indices = @transform_7, window_bounds = array<i64: 32, 64>}, {pipeline_mode = #tpu.pipeline_mode<synchronous>, transform_indices = @transform_8, window_bounds = array<i64: 1, 64>}, {pipeline_mode = #tpu.pipeline_mode<synchronous>, transform_indices = @transform_9, window_bounds = array<i64: 64, 32>}, {transform_indices = @transform_10, window_bounds = array<i64: 2, 8, 32>}]} {
    %c0 = arith.constant 0 : index
    %c0_0 = arith.constant 0 : index
    %0 = vector.load %arg4[%c0, %c0_0] : memref<10x32xf32, #tpu.memory_space<vmem>>, vector<10x32xf32>
    %c0_1 = arith.constant 0 : index
    %c0_2 = arith.constant 0 : index
    %c0_3 = arith.constant 0 : index
    %1 = vector.load %arg1[%c0_1, %c0_2, %c0_3] : memref<2x8x32xf32, #tpu.memory_space<vmem>>, vector<2x8x32xf32>
    %2 = vector.shape_cast %1 : vector<2x8x32xf32> to vector<16x32xf32>
    %c0_4 = arith.constant 0 : index
    %c0_5 = arith.constant 0 : index
    %3 = vector.load %arg2[%c0_4, %c0_5] : memref<2x32xf32, #tpu.memory_space<vmem>>, vector<1x32xf32>
    %c1 = arith.constant 1 : index
    %c0_6 = arith.constant 0 : index
    %4 = vector.load %arg2[%c1, %c0_6] : memref<2x32xf32, #tpu.memory_space<vmem>>, vector<1x32xf32>
    %cst = arith.constant dense<0.000000e+00> : vector<16xf32>
    %5 = vector.multi_reduction <add>, %2, %cst [1] : vector<16x32xf32> to vector<16xf32>
    %6 = vector.shape_cast %5 : vector<16xf32> to vector<16x1xf32>
    %cst_7 = arith.constant 3.200000e+01 : f32
    %7 = vector.broadcast %cst_7 : f32 to vector<16x1xf32>
    %8 = arith.divf %6, %7 : vector<16x1xf32>
    %9 = vector.broadcast %8 : vector<16x1xf32> to vector<16x32xf32>
    %10 = arith.subf %2, %9 : vector<16x32xf32>
    %11 = arith.mulf %10, %10 : vector<16x32xf32>
    %cst_8 = arith.constant dense<0.000000e+00> : vector<16xf32>
    %12 = vector.multi_reduction <add>, %11, %cst_8 [1] : vector<16x32xf32> to vector<16xf32>
    %13 = vector.shape_cast %12 : vector<16xf32> to vector<16x1xf32>
    %cst_9 = arith.constant 3.200000e+01 : f32
    %14 = vector.broadcast %cst_9 : f32 to vector<16x1xf32>
    %15 = arith.divf %13, %14 : vector<16x1xf32>
    %cst_10 = arith.constant 9.99999974E-6 : f32
    %16 = vector.broadcast %cst_10 : f32 to vector<16x1xf32>
    %17 = arith.addf %15, %16 : vector<16x1xf32>
    %18 = math.rsqrt %17 : vector<16x1xf32>
    %19 = vector.broadcast %18 : vector<16x1xf32> to vector<16x32xf32>
    %20 = arith.mulf %10, %19 : vector<16x32xf32>
    %21 = vector.broadcast %3 : vector<1x32xf32> to vector<16x32xf32>
    %22 = arith.mulf %20, %21 : vector<16x32xf32>
    %23 = vector.broadcast %4 : vector<1x32xf32> to vector<16x32xf32>
    %24 = arith.addf %22, %23 : vector<16x32xf32>
    %c0_11 = arith.constant 0 : index
    %c0_12 = arith.constant 0 : index
    %25 = vector.load %arg3[%c0_11, %c0_12] : memref<32x32xbf16, #tpu.memory_space<vmem>>, vector<32x32xbf16>
    %26 = arith.truncf %24 : vector<16x32xf32> to vector<16x32xbf16>
    %cst_13 = arith.constant dense<0.000000e+00> : vector<16x32xf32>
    %27 = tpu.matmul %26, %25, %cst_13 {dimension_numbers = #tpu.dot_dimension_numbers<[1], [0], [0], [1], [0, 0, 1, 1], [], []>} : vector<16x32xbf16>, vector<32x32xbf16>, vector<16x32xf32> -> vector<16x32xf32>
    %28 = vector.extract_strided_slice %0 {offsets = [0, 0], sizes = [1, 32], strides = [1, 1]} : vector<10x32xf32> to vector<1x32xf32>
    %29 = vector.broadcast %28 : vector<1x32xf32> to vector<16x32xf32>
    %30 = arith.addf %27, %29 : vector<16x32xf32>
    %c0_14 = arith.constant 0 : index
    %c0_15 = arith.constant 0 : index
    %31 = vector.load %arg14[%c0_14, %c0_15] : memref<16x32xf32, #tpu.memory_space<vmem>>, vector<16x32xf32>
    tpu.vector_store %arg14[%c0_14, %c0_15], %30 {strides = array<i32>} : memref<16x32xf32, #tpu.memory_space<vmem>>, vector<16x32xf32>,
    %c0_16 = arith.constant 0 : index
    %c0_17 = arith.constant 0 : index
    %32 = vector.load %arg15[%c0_16, %c0_17] : memref<16x32xf32, #tpu.memory_space<vmem>>, vector<16x32xf32>
    tpu.vector_store %arg15[%c0_16, %c0_17], %30 {strides = array<i32>} : memref<16x32xf32, #tpu.memory_space<vmem>>, vector<16x32xf32>,
    %33 = vector.extract_strided_slice %0 {offsets = [1, 0], sizes = [1, 32], strides = [1, 1]} : vector<10x32xf32> to vector<1x32xf32>
    %34 = vector.extract_strided_slice %0 {offsets = [2, 0], sizes = [1, 32], strides = [1, 1]} : vector<10x32xf32> to vector<1x32xf32>
    %cst_18 = arith.constant dense<0.000000e+00> : vector<16xf32>
    %35 = vector.multi_reduction <add>, %30, %cst_18 [1] : vector<16x32xf32> to vector<16xf32>
    %36 = vector.shape_cast %35 : vector<16xf32> to vector<16x1xf32>
    %cst_19 = arith.constant 3.200000e+01 : f32
    %37 = vector.broadcast %cst_19 : f32 to vector<16x1xf32>
    %38 = arith.divf %36, %37 : vector<16x1xf32>
    %39 = vector.broadcast %38 : vector<16x1xf32> to vector<16x32xf32>
    %40 = arith.subf %30, %39 : vector<16x32xf32>
    %41 = arith.mulf %40, %40 : vector<16x32xf32>
    %cst_20 = arith.constant dense<0.000000e+00> : vector<16xf32>
    %42 = vector.multi_reduction <add>, %41, %cst_20 [1] : vector<16x32xf32> to vector<16xf32>
    %43 = vector.shape_cast %42 : vector<16xf32> to vector<16x1xf32>
    %cst_21 = arith.constant 3.200000e+01 : f32
    %44 = vector.broadcast %cst_21 : f32 to vector<16x1xf32>
    %45 = arith.divf %43, %44 : vector<16x1xf32>
    %cst_22 = arith.constant 9.99999974E-6 : f32
    %46 = vector.broadcast %cst_22 : f32 to vector<16x1xf32>
    %47 = arith.addf %45, %46 : vector<16x1xf32>
    %48 = math.rsqrt %47 : vector<16x1xf32>
    %49 = vector.broadcast %48 : vector<16x1xf32> to vector<16x32xf32>
    %50 = arith.mulf %40, %49 : vector<16x32xf32>
    %51 = vector.broadcast %33 : vector<1x32xf32> to vector<16x32xf32>
    %52 = arith.mulf %50, %51 : vector<16x32xf32>
    %53 = vector.broadcast %34 : vector<1x32xf32> to vector<16x32xf32>
    %54 = arith.addf %52, %53 : vector<16x32xf32>
    %c0_23 = arith.constant 0 : index
    %c0_24 = arith.constant 0 : index
    %55 = vector.load %arg5[%c0_23, %c0_24] : memref<32x96xbf16, #tpu.memory_space<vmem>>, vector<32x96xbf16>
    %56 = arith.truncf %54 : vector<16x32xf32> to vector<16x32xbf16>
    %cst_25 = arith.constant dense<0.000000e+00> : vector<16x96xf32>
    %57 = tpu.matmul %56, %55, %cst_25 {dimension_numbers = #tpu.dot_dimension_numbers<[1], [0], [0], [1], [0, 0, 1, 1], [], []>} : vector<16x32xbf16>, vector<32x96xbf16>, vector<16x96xf32> -> vector<16x96xf32>
    %c0_26 = arith.constant 0 : index
    %c0_27 = arith.constant 0 : index
    %58 = vector.load %arg6[%c0_26, %c0_27] : memref<1x96xf32, #tpu.memory_space<vmem>>, vector<1x96xf32>
    %59 = vector.broadcast %58 : vector<1x96xf32> to vector<16x96xf32>
    %60 = arith.addf %57, %59 : vector<16x96xf32>
    %61 = arith.truncf %60 : vector<16x96xf32> to vector<16x96xbf16>
    %c0_28 = arith.constant 0 : index
    %c0_29 = arith.constant 0 : index
    %62 = vector.load %arg12[%c0_28, %c0_29] : memref<16x96xbf16, #tpu.memory_space<vmem>>, vector<16x96xbf16>
    tpu.vector_store %arg12[%c0_28, %c0_29], %61 {strides = array<i32>} : memref<16x96xbf16, #tpu.memory_space<vmem>>, vector<16x96xbf16>,
    %c0_30 = arith.constant 0 : index
    %c0_31 = arith.constant 0 : index
    %63 = vector.load %arg7[%c0_30, %c0_31] : memref<32x32xbf16, #tpu.memory_space<vmem>>, vector<32x32xbf16>
    %64 = vector.extract_strided_slice %0 {offsets = [3, 0], sizes = [1, 32], strides = [1, 1]} : vector<10x32xf32> to vector<1x32xf32>
    %c0_i32 = arith.constant 0 : i32
    %c2_i32 = arith.constant 2 : i32
    %65 = arith.addi %c0_i32, %c2_i32 : i32
    %c1_i32 = arith.constant 1 : i32
    scf.for %arg16 = %c0_i32 to %65 step %c1_i32  : i32 {
      %c8_i32 = arith.constant 8 : i32
      %139 = arith.muli %arg16, %c8_i32 : i32
      %140 = tpu.assume_multiple %139, 8 : i32
      %141 = arith.index_cast %140 : i32 to index
      %c0_61 = arith.constant 0 : index
      %142 = vector.load %arg12[%141, %c0_61] : memref<16x96xbf16, #tpu.memory_space<vmem>>, vector<8x96xbf16>
      %143 = vector.extract_strided_slice %142 {offsets = [0, 0], sizes = [8, 4], strides = [1, 1]} : vector<8x96xbf16> to vector<8x4xbf16>
      %144 = vector.extract_strided_slice %142 {offsets = [0, 32], sizes = [8, 4], strides = [1, 1]} : vector<8x96xbf16> to vector<8x4xbf16>
      %145 = vector.extract_strided_slice %142 {offsets = [0, 64], sizes = [8, 4], strides = [1, 1]} : vector<8x96xbf16> to vector<8x4xbf16>
      %cst_62 = arith.constant dense<0.000000e+00> : vector<8x8xf32>
      %146 = tpu.matmul %143, %144, %cst_62 {dimension_numbers = #tpu.dot_dimension_numbers<[1], [1], [0], [0], [0, 0, 1, 0], [], []>} : vector<8x4xbf16>, vector<8x4xbf16>, vector<8x8xf32> -> vector<8x8xf32>
      %cst_63 = arith.constant dense<0xFF800000> : vector<8xf32>
      %147 = vector.multi_reduction <maximumf>, %146, %cst_63 [1] : vector<8x8xf32> to vector<8xf32>
      %148 = vector.shape_cast %147 : vector<8xf32> to vector<8x1xf32>
      %149 = vector.broadcast %148 : vector<8x1xf32> to vector<8x8xf32>
      %150 = arith.subf %146, %149 : vector<8x8xf32>
      %151 = math.exp %150 : vector<8x8xf32>
      %cst_64 = arith.constant dense<0.000000e+00> : vector<8xf32>
      %152 = vector.multi_reduction <add>, %151, %cst_64 [1] : vector<8x8xf32> to vector<8xf32>
      %153 = vector.shape_cast %152 : vector<8xf32> to vector<8x1xf32>
      %154 = tpu.reciprocal %153 {approx = true} : vector<8x1xf32> -> vector<8x1xf32>
      %155 = vector.broadcast %154 : vector<8x1xf32> to vector<8x8xf32>
      %156 = arith.mulf %151, %155 : vector<8x8xf32>
      %157 = arith.truncf %156 : vector<8x8xf32> to vector<8x8xbf16>
      %cst_65 = arith.constant dense<0.000000e+00> : vector<8x4xf32>
      %158 = tpu.matmul %157, %145, %cst_65 {dimension_numbers = #tpu.dot_dimension_numbers<[1], [0], [0], [1], [0, 0, 1, 1], [], []>} : vector<8x8xbf16>, vector<8x4xbf16>, vector<8x4xf32> -> vector<8x4xf32>
      %159 = arith.truncf %158 : vector<8x4xf32> to vector<8x4xbf16>
      %c0_66 = arith.constant 0 : index
      %c0_67 = arith.constant 0 : index
      %160 = vector.load %arg13[%c0_66, %c0_67] : memref<8x32xbf16, #tpu.memory_space<vmem>>, vector<8x4xbf16>
      tpu.vector_store %arg13[%c0_66, %c0_67], %159 {strides = array<i32>} : memref<8x32xbf16, #tpu.memory_space<vmem>>, vector<8x4xbf16>,
      %161 = vector.extract_strided_slice %142 {offsets = [0, 4], sizes = [8, 4], strides = [1, 1]} : vector<8x96xbf16> to vector<8x4xbf16>
      %162 = vector.extract_strided_slice %142 {offsets = [0, 36], sizes = [8, 4], strides = [1, 1]} : vector<8x96xbf16> to vector<8x4xbf16>
      %163 = vector.extract_strided_slice %142 {offsets = [0, 68], sizes = [8, 4], strides = [1, 1]} : vector<8x96xbf16> to vector<8x4xbf16>
      %cst_68 = arith.constant dense<0.000000e+00> : vector<8x8xf32>
      %164 = tpu.matmul %161, %162, %cst_68 {dimension_numbers = #tpu.dot_dimension_numbers<[1], [1], [0], [0], [0, 0, 1, 0], [], []>} : vector<8x4xbf16>, vector<8x4xbf16>, vector<8x8xf32> -> vector<8x8xf32>
      %cst_69 = arith.constant dense<0xFF800000> : vector<8xf32>
      %165 = vector.multi_reduction <maximumf>, %164, %cst_69 [1] : vector<8x8xf32> to vector<8xf32>
      %166 = vector.shape_cast %165 : vector<8xf32> to vector<8x1xf32>
      %167 = vector.broadcast %166 : vector<8x1xf32> to vector<8x8xf32>
      %168 = arith.subf %164, %167 : vector<8x8xf32>
      %169 = math.exp %168 : vector<8x8xf32>
      %cst_70 = arith.constant dense<0.000000e+00> : vector<8xf32>
      %170 = vector.multi_reduction <add>, %169, %cst_70 [1] : vector<8x8xf32> to vector<8xf32>
      %171 = vector.shape_cast %170 : vector<8xf32> to vector<8x1xf32>
      %172 = tpu.reciprocal %171 {approx = true} : vector<8x1xf32> -> vector<8x1xf32>
      %173 = vector.broadcast %172 : vector<8x1xf32> to vector<8x8xf32>
      %174 = arith.mulf %169, %173 : vector<8x8xf32>
      %175 = arith.truncf %174 : vector<8x8xf32> to vector<8x8xbf16>
      %cst_71 = arith.constant dense<0.000000e+00> : vector<8x4xf32>
      %176 = tpu.matmul %175, %163, %cst_71 {dimension_numbers = #tpu.dot_dimension_numbers<[1], [0], [0], [1], [0, 0, 1, 1], [], []>} : vector<8x8xbf16>, vector<8x4xbf16>, vector<8x4xf32> -> vector<8x4xf32>
      %177 = arith.truncf %176 : vector<8x4xf32> to vector<8x4xbf16>
      %c0_72 = arith.constant 0 : index
      %c4 = arith.constant 4 : index
      %178 = vector.load %arg13[%c0_72, %c4] : memref<8x32xbf16, #tpu.memory_space<vmem>>, vector<8x4xbf16>
      tpu.vector_store %arg13[%c0_72, %c4], %177 {strides = array<i32>} : memref<8x32xbf16, #tpu.memory_space<vmem>>, vector<8x4xbf16>,
      %179 = vector.extract_strided_slice %142 {offsets = [0, 8], sizes = [8, 4], strides = [1, 1]} : vector<8x96xbf16> to vector<8x4xbf16>
      %180 = vector.extract_strided_slice %142 {offsets = [0, 40], sizes = [8, 4], strides = [1, 1]} : vector<8x96xbf16> to vector<8x4xbf16>
      %181 = vector.extract_strided_slice %142 {offsets = [0, 72], sizes = [8, 4], strides = [1, 1]} : vector<8x96xbf16> to vector<8x4xbf16>
      %cst_73 = arith.constant dense<0.000000e+00> : vector<8x8xf32>
      %182 = tpu.matmul %179, %180, %cst_73 {dimension_numbers = #tpu.dot_dimension_numbers<[1], [1], [0], [0], [0, 0, 1, 0], [], []>} : vector<8x4xbf16>, vector<8x4xbf16>, vector<8x8xf32> -> vector<8x8xf32>
      %cst_74 = arith.constant dense<0xFF800000> : vector<8xf32>
      %183 = vector.multi_reduction <maximumf>, %182, %cst_74 [1] : vector<8x8xf32> to vector<8xf32>
      %184 = vector.shape_cast %183 : vector<8xf32> to vector<8x1xf32>
      %185 = vector.broadcast %184 : vector<8x1xf32> to vector<8x8xf32>
      %186 = arith.subf %182, %185 : vector<8x8xf32>
      %187 = math.exp %186 : vector<8x8xf32>
      %cst_75 = arith.constant dense<0.000000e+00> : vector<8xf32>
      %188 = vector.multi_reduction <add>, %187, %cst_75 [1] : vector<8x8xf32> to vector<8xf32>
      %189 = vector.shape_cast %188 : vector<8xf32> to vector<8x1xf32>
      %190 = tpu.reciprocal %189 {approx = true} : vector<8x1xf32> -> vector<8x1xf32>
      %191 = vector.broadcast %190 : vector<8x1xf32> to vector<8x8xf32>
      %192 = arith.mulf %187, %191 : vector<8x8xf32>
      %193 = arith.truncf %192 : vector<8x8xf32> to vector<8x8xbf16>
      %cst_76 = arith.constant dense<0.000000e+00> : vector<8x4xf32>
      %194 = tpu.matmul %193, %181, %cst_76 {dimension_numbers = #tpu.dot_dimension_numbers<[1], [0], [0], [1], [0, 0, 1, 1], [], []>} : vector<8x8xbf16>, vector<8x4xbf16>, vector<8x4xf32> -> vector<8x4xf32>
      %195 = arith.truncf %194 : vector<8x4xf32> to vector<8x4xbf16>
      %c0_77 = arith.constant 0 : index
      %c8 = arith.constant 8 : index
      %196 = vector.load %arg13[%c0_77, %c8] : memref<8x32xbf16, #tpu.memory_space<vmem>>, vector<8x4xbf16>
      tpu.vector_store %arg13[%c0_77, %c8], %195 {strides = array<i32>} : memref<8x32xbf16, #tpu.memory_space<vmem>>, vector<8x4xbf16>,
      %197 = vector.extract_strided_slice %142 {offsets = [0, 12], sizes = [8, 4], strides = [1, 1]} : vector<8x96xbf16> to vector<8x4xbf16>
      %198 = vector.extract_strided_slice %142 {offsets = [0, 44], sizes = [8, 4], strides = [1, 1]} : vector<8x96xbf16> to vector<8x4xbf16>
      %199 = vector.extract_strided_slice %142 {offsets = [0, 76], sizes = [8, 4], strides = [1, 1]} : vector<8x96xbf16> to vector<8x4xbf16>
      %cst_78 = arith.constant dense<0.000000e+00> : vector<8x8xf32>
      %200 = tpu.matmul %197, %198, %cst_78 {dimension_numbers = #tpu.dot_dimension_numbers<[1], [1], [0], [0], [0, 0, 1, 0], [], []>} : vector<8x4xbf16>, vector<8x4xbf16>, vector<8x8xf32> -> vector<8x8xf32>
      %cst_79 = arith.constant dense<0xFF800000> : vector<8xf32>
      %201 = vector.multi_reduction <maximumf>, %200, %cst_79 [1] : vector<8x8xf32> to vector<8xf32>
      %202 = vector.shape_cast %201 : vector<8xf32> to vector<8x1xf32>
      %203 = vector.broadcast %202 : vector<8x1xf32> to vector<8x8xf32>
      %204 = arith.subf %200, %203 : vector<8x8xf32>
      %205 = math.exp %204 : vector<8x8xf32>
      %cst_80 = arith.constant dense<0.000000e+00> : vector<8xf32>
      %206 = vector.multi_reduction <add>, %205, %cst_80 [1] : vector<8x8xf32> to vector<8xf32>
      %207 = vector.shape_cast %206 : vector<8xf32> to vector<8x1xf32>
      %208 = tpu.reciprocal %207 {approx = true} : vector<8x1xf32> -> vector<8x1xf32>
      %209 = vector.broadcast %208 : vector<8x1xf32> to vector<8x8xf32>
      %210 = arith.mulf %205, %209 : vector<8x8xf32>
      %211 = arith.truncf %210 : vector<8x8xf32> to vector<8x8xbf16>
      %cst_81 = arith.constant dense<0.000000e+00> : vector<8x4xf32>
      %212 = tpu.matmul %211, %199, %cst_81 {dimension_numbers = #tpu.dot_dimension_numbers<[1], [0], [0], [1], [0, 0, 1, 1], [], []>} : vector<8x8xbf16>, vector<8x4xbf16>, vector<8x4xf32> -> vector<8x4xf32>
      %213 = arith.truncf %212 : vector<8x4xf32> to vector<8x4xbf16>
      %c0_82 = arith.constant 0 : index
      %c12 = arith.constant 12 : index
      %214 = vector.load %arg13[%c0_82, %c12] : memref<8x32xbf16, #tpu.memory_space<vmem>>, vector<8x4xbf16>
      tpu.vector_store %arg13[%c0_82, %c12], %213 {strides = array<i32>} : memref<8x32xbf16, #tpu.memory_space<vmem>>, vector<8x4xbf16>,
      %215 = vector.extract_strided_slice %142 {offsets = [0, 16], sizes = [8, 4], strides = [1, 1]} : vector<8x96xbf16> to vector<8x4xbf16>
      %216 = vector.extract_strided_slice %142 {offsets = [0, 48], sizes = [8, 4], strides = [1, 1]} : vector<8x96xbf16> to vector<8x4xbf16>
      %217 = vector.extract_strided_slice %142 {offsets = [0, 80], sizes = [8, 4], strides = [1, 1]} : vector<8x96xbf16> to vector<8x4xbf16>
      %cst_83 = arith.constant dense<0.000000e+00> : vector<8x8xf32>
      %218 = tpu.matmul %215, %216, %cst_83 {dimension_numbers = #tpu.dot_dimension_numbers<[1], [1], [0], [0], [0, 0, 1, 0], [], []>} : vector<8x4xbf16>, vector<8x4xbf16>, vector<8x8xf32> -> vector<8x8xf32>
      %cst_84 = arith.constant dense<0xFF800000> : vector<8xf32>
      %219 = vector.multi_reduction <maximumf>, %218, %cst_84 [1] : vector<8x8xf32> to vector<8xf32>
      %220 = vector.shape_cast %219 : vector<8xf32> to vector<8x1xf32>
      %221 = vector.broadcast %220 : vector<8x1xf32> to vector<8x8xf32>
      %222 = arith.subf %218, %221 : vector<8x8xf32>
      %223 = math.exp %222 : vector<8x8xf32>
      %cst_85 = arith.constant dense<0.000000e+00> : vector<8xf32>
      %224 = vector.multi_reduction <add>, %223, %cst_85 [1] : vector<8x8xf32> to vector<8xf32>
      %225 = vector.shape_cast %224 : vector<8xf32> to vector<8x1xf32>
      %226 = tpu.reciprocal %225 {approx = true} : vector<8x1xf32> -> vector<8x1xf32>
      %227 = vector.broadcast %226 : vector<8x1xf32> to vector<8x8xf32>
      %228 = arith.mulf %223, %227 : vector<8x8xf32>
      %229 = arith.truncf %228 : vector<8x8xf32> to vector<8x8xbf16>
      %cst_86 = arith.constant dense<0.000000e+00> : vector<8x4xf32>
      %230 = tpu.matmul %229, %217, %cst_86 {dimension_numbers = #tpu.dot_dimension_numbers<[1], [0], [0], [1], [0, 0, 1, 1], [], []>} : vector<8x8xbf16>, vector<8x4xbf16>, vector<8x4xf32> -> vector<8x4xf32>
      %231 = arith.truncf %230 : vector<8x4xf32> to vector<8x4xbf16>
      %c0_87 = arith.constant 0 : index
      %c16 = arith.constant 16 : index
      %232 = vector.load %arg13[%c0_87, %c16] : memref<8x32xbf16, #tpu.memory_space<vmem>>, vector<8x4xbf16>
      tpu.vector_store %arg13[%c0_87, %c16], %231 {strides = array<i32>} : memref<8x32xbf16, #tpu.memory_space<vmem>>, vector<8x4xbf16>,
      %233 = vector.extract_strided_slice %142 {offsets = [0, 20], sizes = [8, 4], strides = [1, 1]} : vector<8x96xbf16> to vector<8x4xbf16>
      %234 = vector.extract_strided_slice %142 {offsets = [0, 52], sizes = [8, 4], strides = [1, 1]} : vector<8x96xbf16> to vector<8x4xbf16>
      %235 = vector.extract_strided_slice %142 {offsets = [0, 84], sizes = [8, 4], strides = [1, 1]} : vector<8x96xbf16> to vector<8x4xbf16>
      %cst_88 = arith.constant dense<0.000000e+00> : vector<8x8xf32>
      %236 = tpu.matmul %233, %234, %cst_88 {dimension_numbers = #tpu.dot_dimension_numbers<[1], [1], [0], [0], [0, 0, 1, 0], [], []>} : vector<8x4xbf16>, vector<8x4xbf16>, vector<8x8xf32> -> vector<8x8xf32>
      %cst_89 = arith.constant dense<0xFF800000> : vector<8xf32>
      %237 = vector.multi_reduction <maximumf>, %236, %cst_89 [1] : vector<8x8xf32> to vector<8xf32>
      %238 = vector.shape_cast %237 : vector<8xf32> to vector<8x1xf32>
      %239 = vector.broadcast %238 : vector<8x1xf32> to vector<8x8xf32>
      %240 = arith.subf %236, %239 : vector<8x8xf32>
      %241 = math.exp %240 : vector<8x8xf32>
      %cst_90 = arith.constant dense<0.000000e+00> : vector<8xf32>
      %242 = vector.multi_reduction <add>, %241, %cst_90 [1] : vector<8x8xf32> to vector<8xf32>
      %243 = vector.shape_cast %242 : vector<8xf32> to vector<8x1xf32>
      %244 = tpu.reciprocal %243 {approx = true} : vector<8x1xf32> -> vector<8x1xf32>
      %245 = vector.broadcast %244 : vector<8x1xf32> to vector<8x8xf32>
      %246 = arith.mulf %241, %245 : vector<8x8xf32>
      %247 = arith.truncf %246 : vector<8x8xf32> to vector<8x8xbf16>
      %cst_91 = arith.constant dense<0.000000e+00> : vector<8x4xf32>
      %248 = tpu.matmul %247, %235, %cst_91 {dimension_numbers = #tpu.dot_dimension_numbers<[1], [0], [0], [1], [0, 0, 1, 1], [], []>} : vector<8x8xbf16>, vector<8x4xbf16>, vector<8x4xf32> -> vector<8x4xf32>
      %249 = arith.truncf %248 : vector<8x4xf32> to vector<8x4xbf16>
      %c0_92 = arith.constant 0 : index
      %c20 = arith.constant 20 : index
      %250 = vector.load %arg13[%c0_92, %c20] : memref<8x32xbf16, #tpu.memory_space<vmem>>, vector<8x4xbf16>
      tpu.vector_store %arg13[%c0_92, %c20], %249 {strides = array<i32>} : memref<8x32xbf16, #tpu.memory_space<vmem>>, vector<8x4xbf16>,
      %251 = vector.extract_strided_slice %142 {offsets = [0, 24], sizes = [8, 4], strides = [1, 1]} : vector<8x96xbf16> to vector<8x4xbf16>
      %252 = vector.extract_strided_slice %142 {offsets = [0, 56], sizes = [8, 4], strides = [1, 1]} : vector<8x96xbf16> to vector<8x4xbf16>
      %253 = vector.extract_strided_slice %142 {offsets = [0, 88], sizes = [8, 4], strides = [1, 1]} : vector<8x96xbf16> to vector<8x4xbf16>
      %cst_93 = arith.constant dense<0.000000e+00> : vector<8x8xf32>
      %254 = tpu.matmul %251, %252, %cst_93 {dimension_numbers = #tpu.dot_dimension_numbers<[1], [1], [0], [0], [0, 0, 1, 0], [], []>} : vector<8x4xbf16>, vector<8x4xbf16>, vector<8x8xf32> -> vector<8x8xf32>
      %cst_94 = arith.constant dense<0xFF800000> : vector<8xf32>
      %255 = vector.multi_reduction <maximumf>, %254, %cst_94 [1] : vector<8x8xf32> to vector<8xf32>
      %256 = vector.shape_cast %255 : vector<8xf32> to vector<8x1xf32>
      %257 = vector.broadcast %256 : vector<8x1xf32> to vector<8x8xf32>
      %258 = arith.subf %254, %257 : vector<8x8xf32>
      %259 = math.exp %258 : vector<8x8xf32>
      %cst_95 = arith.constant dense<0.000000e+00> : vector<8xf32>
      %260 = vector.multi_reduction <add>, %259, %cst_95 [1] : vector<8x8xf32> to vector<8xf32>
      %261 = vector.shape_cast %260 : vector<8xf32> to vector<8x1xf32>
      %262 = tpu.reciprocal %261 {approx = true} : vector<8x1xf32> -> vector<8x1xf32>
      %263 = vector.broadcast %262 : vector<8x1xf32> to vector<8x8xf32>
      %264 = arith.mulf %259, %263 : vector<8x8xf32>
      %265 = arith.truncf %264 : vector<8x8xf32> to vector<8x8xbf16>
      %cst_96 = arith.constant dense<0.000000e+00> : vector<8x4xf32>
      %266 = tpu.matmul %265, %253, %cst_96 {dimension_numbers = #tpu.dot_dimension_numbers<[1], [0], [0], [1], [0, 0, 1, 1], [], []>} : vector<8x8xbf16>, vector<8x4xbf16>, vector<8x4xf32> -> vector<8x4xf32>
      %267 = arith.truncf %266 : vector<8x4xf32> to vector<8x4xbf16>
      %c0_97 = arith.constant 0 : index
      %c24 = arith.constant 24 : index
      %268 = vector.load %arg13[%c0_97, %c24] : memref<8x32xbf16, #tpu.memory_space<vmem>>, vector<8x4xbf16>
      tpu.vector_store %arg13[%c0_97, %c24], %267 {strides = array<i32>} : memref<8x32xbf16, #tpu.memory_space<vmem>>, vector<8x4xbf16>,
      %269 = vector.extract_strided_slice %142 {offsets = [0, 28], sizes = [8, 4], strides = [1, 1]} : vector<8x96xbf16> to vector<8x4xbf16>
      %270 = vector.extract_strided_slice %142 {offsets = [0, 60], sizes = [8, 4], strides = [1, 1]} : vector<8x96xbf16> to vector<8x4xbf16>
      %271 = vector.extract_strided_slice %142 {offsets = [0, 92], sizes = [8, 4], strides = [1, 1]} : vector<8x96xbf16> to vector<8x4xbf16>
      %cst_98 = arith.constant dense<0.000000e+00> : vector<8x8xf32>
      %272 = tpu.matmul %269, %270, %cst_98 {dimension_numbers = #tpu.dot_dimension_numbers<[1], [1], [0], [0], [0, 0, 1, 0], [], []>} : vector<8x4xbf16>, vector<8x4xbf16>, vector<8x8xf32> -> vector<8x8xf32>
      %cst_99 = arith.constant dense<0xFF800000> : vector<8xf32>
      %273 = vector.multi_reduction <maximumf>, %272, %cst_99 [1] : vector<8x8xf32> to vector<8xf32>
      %274 = vector.shape_cast %273 : vector<8xf32> to vector<8x1xf32>
      %275 = vector.broadcast %274 : vector<8x1xf32> to vector<8x8xf32>
      %276 = arith.subf %272, %275 : vector<8x8xf32>
      %277 = math.exp %276 : vector<8x8xf32>
      %cst_100 = arith.constant dense<0.000000e+00> : vector<8xf32>
      %278 = vector.multi_reduction <add>, %277, %cst_100 [1] : vector<8x8xf32> to vector<8xf32>
      %279 = vector.shape_cast %278 : vector<8xf32> to vector<8x1xf32>
      %280 = tpu.reciprocal %279 {approx = true} : vector<8x1xf32> -> vector<8x1xf32>
      %281 = vector.broadcast %280 : vector<8x1xf32> to vector<8x8xf32>
      %282 = arith.mulf %277, %281 : vector<8x8xf32>
      %283 = arith.truncf %282 : vector<8x8xf32> to vector<8x8xbf16>
      %cst_101 = arith.constant dense<0.000000e+00> : vector<8x4xf32>
      %284 = tpu.matmul %283, %271, %cst_101 {dimension_numbers = #tpu.dot_dimension_numbers<[1], [0], [0], [1], [0, 0, 1, 1], [], []>} : vector<8x8xbf16>, vector<8x4xbf16>, vector<8x4xf32> -> vector<8x4xf32>
      %285 = arith.truncf %284 : vector<8x4xf32> to vector<8x4xbf16>
      %c0_102 = arith.constant 0 : index
      %c28 = arith.constant 28 : index
      %286 = vector.load %arg13[%c0_102, %c28] : memref<8x32xbf16, #tpu.memory_space<vmem>>, vector<8x4xbf16>
      tpu.vector_store %arg13[%c0_102, %c28], %285 {strides = array<i32>} : memref<8x32xbf16, #tpu.memory_space<vmem>>, vector<8x4xbf16>,
      %c0_103 = arith.constant 0 : index
      %c0_104 = arith.constant 0 : index
      %287 = vector.load %arg13[%c0_103, %c0_104] : memref<8x32xbf16, #tpu.memory_space<vmem>>, vector<8x32xbf16>
      %cst_105 = arith.constant dense<0.000000e+00> : vector<8x32xf32>
      %288 = tpu.matmul %287, %63, %cst_105 {dimension_numbers = #tpu.dot_dimension_numbers<[1], [0], [0], [1], [0, 0, 1, 1], [], []>} : vector<8x32xbf16>, vector<32x32xbf16>, vector<8x32xf32> -> vector<8x32xf32>
      %289 = arith.index_cast %140 : i32 to index
      %c0_106 = arith.constant 0 : index
      %290 = vector.load %arg14[%289, %c0_106] : memref<16x32xf32, #tpu.memory_space<vmem>>, vector<8x32xf32>
      %291 = arith.addf %290, %288 : vector<8x32xf32>
      %292 = vector.broadcast %64 : vector<1x32xf32> to vector<8x32xf32>
      %293 = arith.addf %291, %292 : vector<8x32xf32>
      %294 = arith.index_cast %140 : i32 to index
      %c0_107 = arith.constant 0 : index
      %295 = vector.load %arg14[%294, %c0_107] : memref<16x32xf32, #tpu.memory_space<vmem>>, vector<8x32xf32>
      tpu.vector_store %arg14[%294, %c0_107], %293 {strides = array<i32>} : memref<16x32xf32, #tpu.memory_space<vmem>>, vector<8x32xf32>,
    }
    %c2_i32_32 = arith.constant 2 : i32
    %c0_33 = arith.constant 0 : index
    %c0_34 = arith.constant 0 : index
    %66 = vector.load %arg14[%c0_33, %c0_34] : memref<16x32xf32, #tpu.memory_space<vmem>>, vector<16x32xf32>
    %67 = vector.extract_strided_slice %0 {offsets = [4, 0], sizes = [1, 32], strides = [1, 1]} : vector<10x32xf32> to vector<1x32xf32>
    %68 = vector.extract_strided_slice %0 {offsets = [5, 0], sizes = [1, 32], strides = [1, 1]} : vector<10x32xf32> to vector<1x32xf32>
    %cst_35 = arith.constant dense<0.000000e+00> : vector<16xf32>
    %69 = vector.multi_reduction <add>, %66, %cst_35 [1] : vector<16x32xf32> to vector<16xf32>
    %70 = vector.shape_cast %69 : vector<16xf32> to vector<16x1xf32>
    %cst_36 = arith.constant 3.200000e+01 : f32
    %71 = vector.broadcast %cst_36 : f32 to vector<16x1xf32>
    %72 = arith.divf %70, %71 : vector<16x1xf32>
    %73 = vector.broadcast %72 : vector<16x1xf32> to vector<16x32xf32>
    %74 = arith.subf %66, %73 : vector<16x32xf32>
    %75 = arith.mulf %74, %74 : vector<16x32xf32>
    %cst_37 = arith.constant dense<0.000000e+00> : vector<16xf32>
    %76 = vector.multi_reduction <add>, %75, %cst_37 [1] : vector<16x32xf32> to vector<16xf32>
    %77 = vector.shape_cast %76 : vector<16xf32> to vector<16x1xf32>
    %cst_38 = arith.constant 3.200000e+01 : f32
    %78 = vector.broadcast %cst_38 : f32 to vector<16x1xf32>
    %79 = arith.divf %77, %78 : vector<16x1xf32>
    %cst_39 = arith.constant 9.99999974E-6 : f32
    %80 = vector.broadcast %cst_39 : f32 to vector<16x1xf32>
    %81 = arith.addf %79, %80 : vector<16x1xf32>
    %82 = math.rsqrt %81 : vector<16x1xf32>
    %83 = vector.broadcast %82 : vector<16x1xf32> to vector<16x32xf32>
    %84 = arith.mulf %74, %83 : vector<16x32xf32>
    %85 = vector.broadcast %67 : vector<1x32xf32> to vector<16x32xf32>
    %86 = arith.mulf %84, %85 : vector<16x32xf32>
    %87 = vector.broadcast %68 : vector<1x32xf32> to vector<16x32xf32>
    %88 = arith.addf %86, %87 : vector<16x32xf32>
    %c0_40 = arith.constant 0 : index
    %c0_41 = arith.constant 0 : index
    %89 = vector.load %arg8[%c0_40, %c0_41] : memref<32x64xbf16, #tpu.memory_space<vmem>>, vector<32x64xbf16>
    %90 = arith.truncf %88 : vector<16x32xf32> to vector<16x32xbf16>
    %cst_42 = arith.constant dense<0.000000e+00> : vector<16x64xf32>
    %91 = tpu.matmul %90, %89, %cst_42 {dimension_numbers = #tpu.dot_dimension_numbers<[1], [0], [0], [1], [0, 0, 1, 1], [], []>} : vector<16x32xbf16>, vector<32x64xbf16>, vector<16x64xf32> -> vector<16x64xf32>
    %c0_43 = arith.constant 0 : index
    %c0_44 = arith.constant 0 : index
    %92 = vector.load %arg9[%c0_43, %c0_44] : memref<1x64xf32, #tpu.memory_space<vmem>>, vector<1x64xf32>
    %93 = vector.broadcast %92 : vector<1x64xf32> to vector<16x64xf32>
    %94 = arith.addf %91, %93 : vector<16x64xf32>
    %cst_45 = arith.constant 5.000000e-01 : f32
    %95 = vector.broadcast %cst_45 : f32 to vector<16x64xf32>
    %96 = arith.mulf %95, %94 : vector<16x64xf32>
    %cst_46 = arith.constant 0.707106769 : f32
    %97 = vector.broadcast %cst_46 : f32 to vector<16x64xf32>
    %98 = arith.mulf %94, %97 : vector<16x64xf32>
    %99 = math.erf %98 : vector<16x64xf32>
    %cst_47 = arith.constant 1.000000e+00 : f32
    %100 = vector.broadcast %cst_47 : f32 to vector<16x64xf32>
    %101 = arith.addf %100, %99 : vector<16x64xf32>
    %102 = arith.mulf %96, %101 : vector<16x64xf32>
    %c0_48 = arith.constant 0 : index
    %c0_49 = arith.constant 0 : index
    %103 = vector.load %arg10[%c0_48, %c0_49] : memref<64x32xbf16, #tpu.memory_space<vmem>>, vector<64x32xbf16>
    %104 = arith.truncf %102 : vector<16x64xf32> to vector<16x64xbf16>
    %cst_50 = arith.constant dense<0.000000e+00> : vector<16x32xf32>
    %105 = tpu.matmul %104, %103, %cst_50 {dimension_numbers = #tpu.dot_dimension_numbers<[1], [0], [0], [1], [0, 0, 1, 1], [], []>} : vector<16x64xbf16>, vector<64x32xbf16>, vector<16x32xf32> -> vector<16x32xf32>
    %106 = arith.addf %66, %105 : vector<16x32xf32>
    %107 = vector.extract_strided_slice %0 {offsets = [6, 0], sizes = [1, 32], strides = [1, 1]} : vector<10x32xf32> to vector<1x32xf32>
    %108 = vector.broadcast %107 : vector<1x32xf32> to vector<16x32xf32>
    %109 = arith.addf %106, %108 : vector<16x32xf32>
    %110 = vector.extract_strided_slice %0 {offsets = [9, 0], sizes = [1, 32], strides = [1, 1]} : vector<10x32xf32> to vector<1x32xf32>
    %c0_51 = arith.constant 0 : index
    %c0_52 = arith.constant 0 : index
    %111 = vector.load %arg15[%c0_51, %c0_52] : memref<16x32xf32, #tpu.memory_space<vmem>>, vector<16x32xf32>
    %112 = vector.broadcast %110 : vector<1x32xf32> to vector<16x32xf32>
    %113 = arith.mulf %112, %111 : vector<16x32xf32>
    %114 = arith.addf %109, %113 : vector<16x32xf32>
    %115 = vector.extract_strided_slice %0 {offsets = [7, 0], sizes = [1, 32], strides = [1, 1]} : vector<10x32xf32> to vector<1x32xf32>
    %116 = vector.extract_strided_slice %0 {offsets = [8, 0], sizes = [1, 32], strides = [1, 1]} : vector<10x32xf32> to vector<1x32xf32>
    %cst_53 = arith.constant dense<0.000000e+00> : vector<16xf32>
    %117 = vector.multi_reduction <add>, %114, %cst_53 [1] : vector<16x32xf32> to vector<16xf32>
    %118 = vector.shape_cast %117 : vector<16xf32> to vector<16x1xf32>
    %cst_54 = arith.constant 3.200000e+01 : f32
    %119 = vector.broadcast %cst_54 : f32 to vector<16x1xf32>
    %120 = arith.divf %118, %119 : vector<16x1xf32>
    %121 = vector.broadcast %120 : vector<16x1xf32> to vector<16x32xf32>
    %122 = arith.subf %114, %121 : vector<16x32xf32>
    %123 = arith.mulf %122, %122 : vector<16x32xf32>
    %cst_55 = arith.constant dense<0.000000e+00> : vector<16xf32>
    %124 = vector.multi_reduction <add>, %123, %cst_55 [1] : vector<16x32xf32> to vector<16xf32>
    %125 = vector.shape_cast %124 : vector<16xf32> to vector<16x1xf32>
    %cst_56 = arith.constant 3.200000e+01 : f32
    %126 = vector.broadcast %cst_56 : f32 to vector<16x1xf32>
    %127 = arith.divf %125, %126 : vector<16x1xf32>
    %cst_57 = arith.constant 9.99999974E-6 : f32
    %128 = vector.broadcast %cst_57 : f32 to vector<16x1xf32>
    %129 = arith.addf %127, %128 : vector<16x1xf32>
    %130 = math.rsqrt %129 : vector<16x1xf32>
    %131 = vector.broadcast %130 : vector<16x1xf32> to vector<16x32xf32>
    %132 = arith.mulf %122, %131 : vector<16x32xf32>
    %133 = vector.broadcast %115 : vector<1x32xf32> to vector<16x32xf32>
    %134 = arith.mulf %132, %133 : vector<16x32xf32>
    %135 = vector.broadcast %116 : vector<1x32xf32> to vector<16x32xf32>
    %136 = arith.addf %134, %135 : vector<16x32xf32>
    %137 = vector.shape_cast %136 : vector<16x32xf32> to vector<2x8x32xf32>
    %c0_58 = arith.constant 0 : index
    %c0_59 = arith.constant 0 : index
    %c0_60 = arith.constant 0 : index
    %138 = vector.load %arg11[%c0_58, %c0_59, %c0_60] : memref<2x8x32xf32, #tpu.memory_space<vmem>>, vector<2x8x32xf32>
    tpu.vector_store %arg11[%c0_58, %c0_59, %c0_60], %137 {strides = array<i32>} : memref<2x8x32xf32, #tpu.memory_space<vmem>>, vector<2x8x32xf32>,
    return
  }
  func.func @transform_0(%arg0: i32) -> (i32, i32, i32) {
    %c0_i32 = arith.constant 0 : i32
    %c0_i32_0 = arith.constant 0 : i32
    %c0_i32_1 = arith.constant 0 : i32
    return %arg0, %c0_i32, %c0_i32_0 : i32, i32, i32
  }
  func.func @transform_1(%arg0: i32) -> (i32, i32) {
    %c0_i32 = arith.constant 0 : i32
    %c0_i32_0 = arith.constant 0 : i32
    %c0_i32_1 = arith.constant 0 : i32
    return %c0_i32, %c0_i32_0 : i32, i32
  }
  func.func @transform_2(%arg0: i32) -> (i32, i32) {
    %c0_i32 = arith.constant 0 : i32
    %c0_i32_0 = arith.constant 0 : i32
    %c0_i32_1 = arith.constant 0 : i32
    return %c0_i32, %c0_i32_0 : i32, i32
  }
  func.func @transform_3(%arg0: i32) -> (i32, i32) {
    %c0_i32 = arith.constant 0 : i32
    %c0_i32_0 = arith.constant 0 : i32
    %c0_i32_1 = arith.constant 0 : i32
    return %c0_i32, %c0_i32_0 : i32, i32
  }
  func.func @transform_4(%arg0: i32) -> (i32, i32) {
    %c0_i32 = arith.constant 0 : i32
    %c0_i32_0 = arith.constant 0 : i32
    %c0_i32_1 = arith.constant 0 : i32
    return %c0_i32, %c0_i32_0 : i32, i32
  }
  func.func @transform_5(%arg0: i32) -> (i32, i32) {
    %c0_i32 = arith.constant 0 : i32
    %c0_i32_0 = arith.constant 0 : i32
    %c0_i32_1 = arith.constant 0 : i32
    return %c0_i32, %c0_i32_0 : i32, i32
  }
  func.func @transform_6(%arg0: i32) -> (i32, i32) {
    %c0_i32 = arith.constant 0 : i32
    %c0_i32_0 = arith.constant 0 : i32
    %c0_i32_1 = arith.constant 0 : i32
    return %c0_i32, %c0_i32_0 : i32, i32
  }
  func.func @transform_7(%arg0: i32) -> (i32, i32) {
    %c0_i32 = arith.constant 0 : i32
    %c0_i32_0 = arith.constant 0 : i32
    %c0_i32_1 = arith.constant 0 : i32
    return %c0_i32, %c0_i32_0 : i32, i32
  }
  func.func @transform_8(%arg0: i32) -> (i32, i32) {
    %c0_i32 = arith.constant 0 : i32
    %c0_i32_0 = arith.constant 0 : i32
    %c0_i32_1 = arith.constant 0 : i32
    return %c0_i32, %c0_i32_0 : i32, i32
  }
  func.func @transform_9(%arg0: i32) -> (i32, i32) {
    %c0_i32 = arith.constant 0 : i32
    %c0_i32_0 = arith.constant 0 : i32
    %c0_i32_1 = arith.constant 0 : i32
    return %c0_i32, %c0_i32_0 : i32, i32
  }
  func.func @transform_10(%arg0: i32) -> (i32, i32, i32) {
    %c0_i32 = arith.constant 0 : i32
    %c0_i32_0 = arith.constant 0 : i32
    %c0_i32_1 = arith.constant 0 : i32
    return %arg0, %c0_i32, %c0_i32_0 : i32, i32, i32
  }
}

</mosaic_0001>

<llo_original>
// kernel: multihead_attention_bridge.1
$region0: #{multihead_attention_bridge.1}
  #allocation0 [shape = 'u32[]', space=smem, size = 0x4, offset = 0x4, fixed_abs, tag = 'smem constant byte address 0x4 - core index']
  #allocation1 [shape = 'u32[72,128]{1,0:T(1,128)}', space=vmem, size = 0x9000, scoped, tag = 'internal scratch']
  #allocation2 [shape = 'bf16[16,96]{1,0:T(8,128)(2,1)}', space=vmem, size = 0x1000, scoped, tag = 'scratch operand']
  #allocation3 [shape = 'bf16[8,32]{1,0:T(8,128)(2,1)}', space=vmem, size = 0x800, scoped, tag = 'scratch operand']
  #allocation4 [shape = 'f32[16,32]{1,0:T(8,128)}', space=vmem, size = 0x2000, scoped, tag = 'scratch operand']
  #allocation5 [shape = 'f32[16,32]{1,0:T(8,128)}', space=vmem, size = 0x2000, scoped, tag = 'scratch operand']
  %s0 = inlined_call_operand.vmem [shape: f32[2,8,32], index: 0, kind: input, shape index: {}]
  %s1 = inlined_call_operand.vmem [shape: f32[2,32], index: 1, kind: input, shape index: {}]
  %s2 = inlined_call_operand.vmem [shape: bf16[32,32], index: 2, kind: input, shape index: {}]
  %s3 = inlined_call_operand.vmem [shape: f32[10,32], index: 3, kind: input, shape index: {}]
  %s4 = inlined_call_operand.vmem [shape: bf16[32,96], index: 4, kind: input, shape index: {}]
  %s5 = inlined_call_operand.vmem [shape: f32[1,96], index: 5, kind: input, shape index: {}]
  %s6 = inlined_call_operand.vmem [shape: bf16[32,32], index: 6, kind: input, shape index: {}]
  %s7 = inlined_call_operand.vmem [shape: bf16[32,64], index: 7, kind: input, shape index: {}]
  %s8 = inlined_call_operand.vmem [shape: f32[1,64], index: 8, kind: input, shape index: {}]
  %s9 = inlined_call_operand.vmem [shape: bf16[64,32], index: 9, kind: input, shape index: {}]
  %s10 = inlined_call_operand.hbm [shape: f32[2,8,32], index: 10, kind: output, shape index: {}]
  %s11 = sld [smem:[#allocation0]]
  $region57: #{multihead_attention_bridge.1} parent=0
    _
  %s13 = ssub.s32 1, %s11
  %s14 = scalar_select 0, %s13, %s11
  $region1: #{multihead_attention_bridge.1} parent=0
    #allocation6 [shape = 'u8[8192]{0}', space=vmem, size = 0x2000, scoped, tag = 'output window, operand 0, single buffered']
    #allocation7 [shape = 's32[1]{0}', space=sflag, size = 0x4, scoped, tag = 'scoped memory for multihead_attention_bridge.1']
    %15 = vsyncpa [#allocation7], 0
    // Predicated region
    $region2: #{multihead_attention_bridge.1} parent=1 // pred_check
      _
    $region3: #{multihead_attention_bridge.1} parent=1 // pred_check_branch
      %17 = sbr.rel (0) target = $region5
    $region4: #{multihead_attention_bridge.1} parent=1 // pred_region
      _
    $region5: #{multihead_attention_bridge.1} parent=1 // pred_fallthru
      _
    // Predicated region
    $region6: #{multihead_attention_bridge.1} parent=1 // pred_check
      _
    $region7: #{multihead_attention_bridge.1} parent=1 // pred_check_branch
      %19 = sbr.rel (0) target = $region9
    $region8: #{multihead_attention_bridge.1} parent=1 // pred_region
      _
    $region9: #{multihead_attention_bridge.1} parent=1 // pred_fallthru
      _
    // Predicated region
    $region10: #{multihead_attention_bridge.1} parent=1 // pred_check
      _
    $region11: #{multihead_attention_bridge.1} parent=1 // pred_check_branch
      %21 = sbr.rel (0) target = $region13
    $region12: #{multihead_attention_bridge.1} parent=1 // pred_region
      _
    $region13: #{multihead_attention_bridge.1} parent=1 // pred_fallthru
      _
    // Predicated region
    $region14: #{multihead_attention_bridge.1} parent=1 // pred_check
      _
    $region15: #{multihead_attention_bridge.1} parent=1 // pred_check_branch
      %23 = sbr.rel (0) target = $region17
    $region16: #{multihead_attention_bridge.1} parent=1 // pred_region
      _
    $region17: #{multihead_attention_bridge.1} parent=1 // pred_fallthru
      _
    // Predicated region
    $region18: #{multihead_attention_bridge.1} parent=1 // pred_check
      _
    $region19: #{multihead_attention_bridge.1} parent=1 // pred_check_branch
      %25 = sbr.rel (0) target = $region21
    $region20: #{multihead_attention_bridge.1} parent=1 // pred_region
      _
    $region21: #{multihead_attention_bridge.1} parent=1 // pred_fallthru
      _
    // Predicated region
    $region22: #{multihead_attention_bridge.1} parent=1 // pred_check
      _
    $region23: #{multihead_attention_bridge.1} parent=1 // pred_check_branch
      %27 = sbr.rel (0) target = $region25
    $region24: #{multihead_attention_bridge.1} parent=1 // pred_region
      _
    $region25: #{multihead_attention_bridge.1} parent=1 // pred_fallthru
      _
    // Predicated region
    $region26: #{multihead_attention_bridge.1} parent=1 // pred_check
      _
    $region27: #{multihead_attention_bridge.1} parent=1 // pred_check_branch
      %29 = sbr.rel (0) target = $region29
    $region28: #{multihead_attention_bridge.1} parent=1 // pred_region
      _
    $region29: #{multihead_attention_bridge.1} parent=1 // pred_fallthru
      _
    // Predicated region
    $region30: #{multihead_attention_bridge.1} parent=1 // pred_check
      _
    $region31: #{multihead_attention_bridge.1} parent=1 // pred_check_branch
      %31 = sbr.rel (0) target = $region33
    $region32: #{multihead_attention_bridge.1} parent=1 // pred_region
      _
    $region33: #{multihead_attention_bridge.1} parent=1 // pred_fallthru
      _
    // Predicated region
    $region34: #{multihead_attention_bridge.1} parent=1 // pred_check
      _
    $region35: #{multihead_attention_bridge.1} parent=1 // pred_check_branch
      %33 = sbr.rel (0) target = $region37
    $region36: #{multihead_attention_bridge.1} parent=1 // pred_region
      _
    $region37: #{multihead_attention_bridge.1} parent=1 // pred_fallthru
      _
    // Predicated region
    $region38: #{multihead_attention_bridge.1} parent=1 // pred_check
      _
    $region39: #{multihead_attention_bridge.1} parent=1 // pred_check_branch
      %35 = sbr.rel (0) target = $region41
    $region40: #{multihead_attention_bridge.1} parent=1 // pred_region
      _
    $region41: #{multihead_attention_bridge.1} parent=1 // pred_fallthru
      _
    %v37 = vld [vmem:[%s3] sm:$0xff]
    %v38 = vld [vmem:[%s3 + $0x8] sm:$0x3]
    %v39 = vld [vmem:[%s0] sm:$0xff]
    %v40 = vld [vmem:[%s0 + $0x8] sm:$0xff]
    %v41 = vld [vmem:[%s1] sm:$0x1]
    %v42 = vld [vmem:[%s1 + $0x1] sm:$0x1]
    %vm43 = vcmask 261120
    %v44 = vsel %vm43, %v39, 0.0
    %45 = vadd.xlane.f32.xlu0 %v44
    %v46 = vpop.xlane.xlu0 %45
    %v47 = vsel %vm43, %v40, 0.0
    %48 = vadd.xlane.f32.xlu0 %v47
    %v49 = vpop.xlane.xlu0 %48
    %v50 = vrcp.pop 32.0
    %v51 = vmul.f32 32.0, %v50
    %v52 = vsub.f32 1.0, %v51
    %v53 = vmul.f32 %v50, %v52
    %v54 = vadd.f32 %v50, %v53
    %vm55 = vweird.f32 %v50
    %v56 = vsel %vm55, %v50, %v54
    %v57 = vmul.f32 %v46, %v56
    %v58 = vmul.f32 %v49, %v56
    %v59 = vsub.f32 %v39, %v57
    %v60 = vsub.f32 %v40, %v58
    %v61 = vmul.f32 %v59, %v59
    %v62 = vmul.f32 %v60, %v60
    %v63 = vsel %vm43, %v61, 0.0
    %64 = vadd.xlane.f32.xlu0 %v63
    %v65 = vpop.xlane.xlu0 %64
    %v66 = vsel %vm43, %v62, 0.0
    %67 = vadd.xlane.f32.xlu0 %v66
    %v68 = vpop.xlane.xlu0 %67
    %v69 = vmul.f32 %v65, %v56
    %v70 = vmul.f32 %v68, %v56
    %v71 = vadd.f32 %v69, 1e-05
    %v72 = vadd.f32 %v70, 1e-05
    %v73 = vrsqrt.pop %v71
    %v74 = vmul.f32 %v73, %v71
    %v75 = vmul.f32 %v74, %v73
    %v76 = vmul.f32 0.5, %v75
    %v77 = vsub.f32 1.5, %v76
    %v78 = vmul.f32 %v73, %v77
    %vm79 = vweird.f32 %v71
    %vm80 = vweird.f32 %v73
    %vm81 = vmor %vm79, %vm80
    %v82 = vsel %vm81, %v73, %v78
    %v83 = vrsqrt.pop %v72
    %v84 = vmul.f32 %v83, %v72
    %v85 = vmul.f32 %v84, %v83
    %v86 = vmul.f32 0.5, %v85
    %v87 = vsub.f32 1.5, %v86
    %v88 = vmul.f32 %v83, %v87
    %vm89 = vweird.f32 %v72
    %vm90 = vweird.f32 %v83
    %vm91 = vmor %vm89, %vm90
    %v92 = vsel %vm91, %v83, %v88
    %v93 = vmul.f32 %v59, %v82
    %v94 = vmul.f32 %v60, %v92
    %v95 = vperm.slane %v41, 0
    %v96 = vmul.f32 %v93, %v95
    %v97 = vmul.f32 %v94, %v95
    %v98 = vperm.slane %v42, 0
    %v99 = vadd.f32 %v96, %v98
    %v100 = vadd.f32 %v97, %v98
    %v101 = vld [vmem:[%s2] sm:$0xf]
    %v102 = vld [vmem:[%s2 + $0x4] sm:$0xf]
    %v103 = vld [vmem:[%s2 + $0x8] sm:$0xf]
    %v104 = vld [vmem:[%s2 + $0xc] sm:$0xf]
    %v105 = vpack.c.bf16 %v100, %v99
    %v106 = vperm.slane %v37, 0
    %v111 = vunpack.c.l.b16 %v101
    %v112 = vunpack.c.l.b16 %v102
    %v113 = vunpack.c.l.b16 %v103
    %v114 = vunpack.c.l.b16 %v104
    %v115 = vpack.c.b16 %v112, %v111
    %v116 = vpack.c.b16 %v114, %v113
    %v120 = vsel %vm43, %v105, 0
    %122 = vmatpush.bf16.msra.mxu0 0
    %123 = vmatpush.bf16.msra.mxu0 0
    %124 = vmatpush.bf16.msra.mxu0 0
    %125 = vmatpush.bf16.msra.mxu0 0
    %126 = vmatpush.bf16.msra.mxu0 0
    %127 = vmatpush.bf16.msra.mxu0 0
    %128 = vmatpush.bf16.msra.mxu0 %v116
    %129 = vmatpush.bf16.msra.mxu0 %v115
    %130 = vmatmul.bf16.gmra.mxu0 %v120
    %v131 = vpop.f32.mrf.mxu0
    %v132 = vadd.f32 %v106, %v131
    %v133 = vpop.f32.mrf.mxu0
    %v134 = vadd.f32 %v106, %v133
    %135 = vdwg.mxu0
    %136 = vst.msk [vmem:[#allocation4] sm:$0xff] %vm43, %v132
    %137 = vst.msk [vmem:[#allocation4 + $0x8] sm:$0xff] %vm43, %v134
    %138 = vst.msk [vmem:[#allocation5] sm:$0xff] %vm43, %v132
    %139 = vst.msk [vmem:[#allocation5 + $0x8] sm:$0xff] %vm43, %v134
    %v140 = vsel %vm43, %v132, 0.0
    %141 = vadd.xlane.f32.xlu0 %v140
    %v142 = vpop.xlane.xlu0 %141
    %v143 = vsel %vm43, %v134, 0.0
    %144 = vadd.xlane.f32.xlu0 %v143
    %v145 = vpop.xlane.xlu0 %144
    %v146 = vmul.f32 %v142, %v56
    %v147 = vmul.f32 %v145, %v56
    %v148 = vsub.f32 %v132, %v146
    %v149 = vsub.f32 %v134, %v147
    %v150 = vmul.f32 %v148, %v148
    %v151 = vmul.f32 %v149, %v149
    %v152 = vsel %vm43, %v150, 0.0
    %153 = vadd.xlane.f32.xlu0 %v152
    %v154 = vpop.xlane.xlu0 %153
    %v155 = vsel %vm43, %v151, 0.0
    %156 = vadd.xlane.f32.xlu0 %v155
    %v157 = vpop.xlane.xlu0 %156
    %v158 = vmul.f32 %v154, %v56
    %v159 = vmul.f32 %v157, %v56
    %v160 = vadd.f32 %v158, 1e-05
    %v161 = vadd.f32 %v159, 1e-05
    %v162 = vrsqrt.pop %v160
    %v163 = vmul.f32 %v162, %v160
    %v164 = vmul.f32 %v163, %v162
    %v165 = vmul.f32 0.5, %v164
    %v166 = vsub.f32 1.5, %v165
    %v167 = vmul.f32 %v162, %v166
    %vm168 = vweird.f32 %v160
    %vm169 = vweird.f32 %v162
    %vm170 = vmor %vm168, %vm169
    %v171 = vsel %vm170, %v162, %v167
    %v172 = vrsqrt.pop %v161
    %v173 = vmul.f32 %v172, %v161
    %v174 = vmul.f32 %v173, %v172
    %v175 = vmul.f32 0.5, %v174
    %v176 = vsub.f32 1.5, %v175
    %v177 = vmul.f32 %v172, %v176
    %vm178 = vweird.f32 %v161
    %vm179 = vweird.f32 %v172
    %vm180 = vmor %vm178, %vm179
    %v181 = vsel %vm180, %v172, %v177
    %v182 = vmul.f32 %v148, %v171
    %v183 = vmul.f32 %v149, %v181
    %v184 = vperm.slane %v37, 1
    %v185 = vmul.f32 %v182, %v184
    %v186 = vmul.f32 %v183, %v184
    %v187 = vperm.slane %v37, 2
    %v188 = vadd.f32 %v185, %v187
    %v189 = vadd.f32 %v186, %v187
    %v190 = vld [vmem:[%s4] sm:$0xf]
    %v191 = vld [vmem:[%s4 + $0x4] sm:$0xf]
    %v192 = vld [vmem:[%s4 + $0x8] sm:$0xf]
    %v193 = vld [vmem:[%s4 + $0xc] sm:$0xf]
    %v194 = vpack.c.bf16 %v189, %v188
    %v195 = vld [vmem:[%s5] sm:$0x1]
    %v197 = vperm.slane %v195, 0
    %v203 = vunpack.c.l.b16 %v190
    %v204 = vunpack.c.l.b16 %v191
    %v205 = vunpack.c.l.b16 %v192
    %v206 = vunpack.c.l.b16 %v193
    %v207 = vpack.c.b16 %v204, %v203
    %v208 = vpack.c.b16 %v206, %v205
    %v212 = vsel %vm43, %v194, 0
    %214 = vmatpush.bf16.msra.mxu0 0
    %215 = vmatpush.bf16.msra.mxu0 0
    %216 = vmatpush.bf16.msra.mxu0 0
    %217 = vmatpush.bf16.msra.mxu0 0
    %218 = vmatpush.bf16.msra.mxu0 0
    %219 = vmatpush.bf16.msra.mxu0 0
    %220 = vmatpush.bf16.msra.mxu0 %v208
    %221 = vmatpush.bf16.msra.mxu0 %v207
    %222 = vmatmul.bf16.gmra.mxu0 %v212
    %v223 = vpop.f32.mrf.mxu0
    %v224 = vadd.f32 %v197, %v223
    %v225 = vpop.f32.mrf.mxu0
    %v226 = vadd.f32 %v197, %v225
    %227 = vdwg.mxu0
    %v228 = vpack.c.bf16 %v224, %v224
    %v229 = vpack.c.bf16 %v226, %v226
    %vm230 = vcmask 781312
    %231 = vst.msk [vmem:[#allocation2] sm:$0xf] %vm230, %v228
    %232 = vst.msk [vmem:[#allocation2 + $0x4] sm:$0xf] %vm230, %v229
    %v233 = vld [vmem:[%s6] sm:$0xf]
    %v234 = vld [vmem:[%s6 + $0x4] sm:$0xf]
    %v235 = vld [vmem:[%s6 + $0x8] sm:$0xf]
    %v236 = vld [vmem:[%s6 + $0xc] sm:$0xf]
    loop: start=0, step=1, limit=2
    $region42: #{multihead_attention_bridge.1} parent=1 // loop_pre_header
      _
    $region43: #{multihead_attention_bridge.1} parent=1 // loop_header
      %s238 = sphi 0, %s242
      %p239 = scmp.ge.s32.totalorder %s238, 2
    $region44: #{multihead_attention_bridge.1} parent=1 // loop_header_branch
      %241 = sbr.rel (%p239) target = $region48
    $region45: #{multihead_attention_bridge.1} parent=1 // loop_body
      %s243 = smul.u32 %s238, 8
      %s244 = sshra.s32 %s243, 3
      %s245 = sand.u32 %s243, 7
      %s246 = smul.addr %s244, 4
      %s247 = scalar_lea.vmem [#allocation2], %s246
      %v248 = vld [vmem:[%s247] sm:$0xf]
      %v250 = vunpack.c.l.b16 %v248
      %v251 = vpack.c.b16 %v250, %v250
      %252 = vrot.lane.b32.xlu0 %v251, 96
      %v253 = vpop.permute.xlu0 %252
      %vm254 = vcmask 31744
      %v256 = vsel %vm254, %v248, 0
      %v259 = vsel %vm254, %v253, 0
      %261 = vmatpush.bf16.xpose.msra.mxu0 0
      %262 = vmatpush.bf16.xpose.msra.mxu0 0
      %263 = vmatpush.bf16.xpose.msra.mxu0 0
      %264 = vmatpush.bf16.xpose.msra.mxu0 0
      %265 = vmatpush.bf16.xpose.msra.mxu0 0
      %266 = vmatpush.bf16.xpose.msra.mxu0 0
      %267 = vmatpush.bf16.xpose.msra.mxu0 0
      %268 = vmatpush.bf16.xpose.msra.mxu0 %v259
      %269 = vmatmul.bf16.gmra.mxu0 %v256
      %v270 = vpop.f32.mrf.mxu0
      %v271 = vadd.f32 0.0, %v270
      %v272 = vpop.f32.mrf.mxu0
      %273 = vdwg.mxu0
      %vm274 = vcmask 64512
      %v275 = vsel %vm274, %v271, -inf
      %276 = vmax.xlane.f32.xlu0 %v275
      %v277 = vpop.xlane.xlu0 %276
      %v278 = vsub.f32 %v271, %v277
      %v279 = vmul.f32 %v278, 1.442695
      %v280 = vpow.pop %v279
      %v281 = vsel %vm274, %v280, 0.0
      %282 = vadd.xlane.f32.xlu0 %v281
      %v283 = vpop.xlane.xlu0 %282
      %v284 = vrcp.pop %v283
      %v285 = vmul.f32 %v280, %v284
      %v286 = vpack.c.bf16 %v285, %v285
      %287 = vrot.lane.b32.xlu0 %v251, 64
      %v288 = vpop.permute.xlu0 %287
      %v290 = vsel %vm274, %v286, 0
      %vm292 = vcmask 1043456
      %v294 = vsel %vm292, %v288, 0
      %296 = vmatpush.bf16.msra.mxu0 0
      %297 = vmatpush.bf16.msra.mxu0 0
      %298 = vmatpush.bf16.msra.mxu0 0
      %299 = vmatpush.bf16.msra.mxu0 0
      %300 = vmatpush.bf16.msra.mxu0 0
      %301 = vmatpush.bf16.msra.mxu0 0
      %302 = vmatpush.bf16.msra.mxu0 0
      %303 = vmatpush.bf16.msra.mxu0 %v294
      %304 = vmatmul.bf16.gmra.mxu0 %v290
      %v305 = vpop.f32.mrf.mxu0
      %v306 = vadd.f32 0.0, %v305
      %v307 = vpop.f32.mrf.mxu0
      %308 = vdwg.mxu0
      %v309 = vpack.c.bf16 %v306, %v306
      %vm310 = vcmask 27648
      %311 = vst.msk [vmem:[#allocation3] sm:$0xf] %vm310, %v309
      %312 = vrot.lane.b32.xlu0 %v251, 124
      %v313 = vpop.permute.xlu0 %312
      %314 = vrot.lane.b32.xlu0 %v251, 92
      %v315 = vpop.permute.xlu0 %314
      %v317 = vsel %vm254, %v313, 0
      %v320 = vsel %vm254, %v315, 0
      %322 = vmatpush.bf16.xpose.msra.mxu0 0
      %323 = vmatpush.bf16.xpose.msra.mxu0 0
      %324 = vmatpush.bf16.xpose.msra.mxu0 0
      %325 = vmatpush.bf16.xpose.msra.mxu0 0
      %326 = vmatpush.bf16.xpose.msra.mxu0 0
      %327 = vmatpush.bf16.xpose.msra.mxu0 0
      %328 = vmatpush.bf16.xpose.msra.mxu0 0
      %329 = vmatpush.bf16.xpose.msra.mxu0 %v320
      %330 = vmatmul.bf16.gmra.mxu0 %v317
      %v331 = vpop.f32.mrf.mxu0
      %v332 = vadd.f32 0.0, %v331
      %v333 = vpop.f32.mrf.mxu0
      %334 = vdwg.mxu0
      %v335 = vsel %vm274, %v332, -inf
      %336 = vmax.xlane.f32.xlu0 %v335
      %v337 = vpop.xlane.xlu0 %336
      %v338 = vsub.f32 %v332, %v337
      %v339 = vmul.f32 %v338, 1.442695
      %v340 = vpow.pop %v339
      %v341 = vsel %vm274, %v340, 0.0
      %342 = vadd.xlane.f32.xlu0 %v341
      %v343 = vpop.xlane.xlu0 %342
      %v344 = vrcp.pop %v343
      %v345 = vmul.f32 %v340, %v344
      %v346 = vpack.c.bf16 %v345, %v345
      %347 = vrot.lane.b32.xlu0 %v251, 60
      %v348 = vpop.permute.xlu0 %347
      %v350 = vsel %vm274, %v346, 0
      %v353 = vsel %vm292, %v348, 0
      %355 = vmatpush.bf16.msra.mxu0 0
      %356 = vmatpush.bf16.msra.mxu0 0
      %357 = vmatpush.bf16.msra.mxu0 0
      %358 = vmatpush.bf16.msra.mxu0 0
      %359 = vmatpush.bf16.msra.mxu0 0
      %360 = vmatpush.bf16.msra.mxu0 0
      %361 = vmatpush.bf16.msra.mxu0 0
      %362 = vmatpush.bf16.msra.mxu0 %v353
      %363 = vmatmul.bf16.gmra.mxu0 %v350
      %v364 = vpop.f32.mrf.mxu0
      %v365 = vadd.f32 0.0, %v364
      %v366 = vpop.f32.mrf.mxu0
      %367 = vdwg.mxu0
      %v368 = vpack.c.bf16 %v365, %v365
      %370 = vrot.lane.b32.xlu0 %v368, 4
      %v371 = vpop.permute.xlu0 %370
      %vm373 = vcmask 60448
      %374 = vst.msk [vmem:[#allocation3] sm:$0xf] %vm373, %v371
      %375 = vrot.lane.b32.xlu0 %v251, 120
      %v376 = vpop.permute.xlu0 %375
      %377 = vrot.lane.b32.xlu0 %v251, 88
      %v378 = vpop.permute.xlu0 %377
      %v380 = vsel %vm254, %v376, 0
      %v383 = vsel %vm254, %v378, 0
      %385 = vmatpush.bf16.xpose.msra.mxu0 0
      %386 = vmatpush.bf16.xpose.msra.mxu0 0
      %387 = vmatpush.bf16.xpose.msra.mxu0 0
      %388 = vmatpush.bf16.xpose.msra.mxu0 0
      %389 = vmatpush.bf16.xpose.msra.mxu0 0
      %390 = vmatpush.bf16.xpose.msra.mxu0 0
      %391 = vmatpush.bf16.xpose.msra.mxu0 0
      %392 = vmatpush.bf16.xpose.msra.mxu0 %v383
      %393 = vmatmul.bf16.gmra.mxu0 %v380
      %v394 = vpop.f32.mrf.mxu0
      %v395 = vadd.f32 0.0, %v394
      %v396 = vpop.f32.mrf.mxu0
      %397 = vdwg.mxu0
      %v398 = vsel %vm274, %v395, -inf
      %399 = vmax.xlane.f32.xlu0 %v398
      %v400 = vpop.xlane.xlu0 %399
      %v401 = vsub.f32 %v395, %v400
      %v402 = vmul.f32 %v401, 1.442695
      %v403 = vpow.pop %v402
      %v404 = vsel %vm274, %v403, 0.0
      %405 = vadd.xlane.f32.xlu0 %v404
      %v406 = vpop.xlane.xlu0 %405
      %v407 = vrcp.pop %v406
      %v408 = vmul.f32 %v403, %v407
      %v409 = vpack.c.bf16 %v408, %v408
      %410 = vrot.lane.b32.xlu0 %v251, 56
      %v411 = vpop.permute.xlu0 %410
      %v413 = vsel %vm274, %v409, 0
      %v416 = vsel %vm292, %v411, 0
      %418 = vmatpush.bf16.msra.mxu0 0
      %419 = vmatpush.bf16.msra.mxu0 0
      %420 = vmatpush.bf16.msra.mxu0 0
      %421 = vmatpush.bf16.msra.mxu0 0
      %422 = vmatpush.bf16.msra.mxu0 0
      %423 = vmatpush.bf16.msra.mxu0 0
      %424 = vmatpush.bf16.msra.mxu0 0
      %425 = vmatpush.bf16.msra.mxu0 %v416
      %426 = vmatmul.bf16.gmra.mxu0 %v413
      %v427 = vpop.f32.mrf.mxu0
      %v428 = vadd.f32 0.0, %v427
      %v429 = vpop.f32.mrf.mxu0
      %430 = vdwg.mxu0
      %v431 = vpack.c.bf16 %v428, %v428
      %433 = vrot.lane.b32.xlu0 %v431, 8
      %v434 = vpop.permute.xlu0 %433
      %vm436 = vcmask 93248
      %437 = vst.msk [vmem:[#allocation3] sm:$0xf] %vm436, %v434
      %438 = vrot.lane.b32.xlu0 %v251, 116
      %v439 = vpop.permute.xlu0 %438
      %440 = vrot.lane.b32.xlu0 %v251, 84
      %v441 = vpop.permute.xlu0 %440
      %v443 = vsel %vm254, %v439, 0
      %v446 = vsel %vm254, %v441, 0
      %448 = vmatpush.bf16.xpose.msra.mxu0 0
      %449 = vmatpush.bf16.xpose.msra.mxu0 0
      %450 = vmatpush.bf16.xpose.msra.mxu0 0
      %451 = vmatpush.bf16.xpose.msra.mxu0 0
      %452 = vmatpush.bf16.xpose.msra.mxu0 0
      %453 = vmatpush.bf16.xpose.msra.mxu0 0
      %454 = vmatpush.bf16.xpose.msra.mxu0 0
      %455 = vmatpush.bf16.xpose.msra.mxu0 %v446
      %456 = vmatmul.bf16.gmra.mxu0 %v443
      %v457 = vpop.f32.mrf.mxu0
      %v458 = vadd.f32 0.0, %v457
      %v459 = vpop.f32.mrf.mxu0
      %460 = vdwg.mxu0
      %v461 = vsel %vm274, %v458, -inf
      %462 = vmax.xlane.f32.xlu0 %v461
      %v463 = vpop.xlane.xlu0 %462
      %v464 = vsub.f32 %v458, %v463
      %v465 = vmul.f32 %v464, 1.442695
      %v466 = vpow.pop %v465
      %v467 = vsel %vm274, %v466, 0.0
      %468 = vadd.xlane.f32.xlu0 %v467
      %v469 = vpop.xlane.xlu0 %468
      %v470 = vrcp.pop %v469
      %v471 = vmul.f32 %v466, %v470
      %v472 = vpack.c.bf16 %v471, %v471
      %473 = vrot.lane.b32.xlu0 %v251, 52
      %v474 = vpop.permute.xlu0 %473
      %v476 = vsel %vm274, %v472, 0
      %v479 = vsel %vm292, %v474, 0
      %481 = vmatpush.bf16.msra.mxu0 0
      %482 = vmatpush.bf16.msra.mxu0 0
      %483 = vmatpush.bf16.msra.mxu0 0
      %484 = vmatpush.bf16.msra.mxu0 0
      %485 = vmatpush.bf16.msra.mxu0 0
      %486 = vmatpush.bf16.msra.mxu0 0
      %487 = vmatpush.bf16.msra.mxu0 0
      %488 = vmatpush.bf16.msra.mxu0 %v479
      %489 = vmatmul.bf16.gmra.mxu0 %v476
      %v490 = vpop.f32.mrf.mxu0
      %v491 = vadd.f32 0.0, %v490
      %v492 = vpop.f32.mrf.mxu0
      %493 = vdwg.mxu0
      %v494 = vpack.c.bf16 %v491, %v491
      %496 = vrot.lane.b32.xlu0 %v494, 12
      %v497 = vpop.permute.xlu0 %496
      %vm499 = vcmask 126048
      %500 = vst.msk [vmem:[#allocation3] sm:$0xf] %vm499, %v497
      %501 = vrot.lane.b32.xlu0 %v251, 112
      %v502 = vpop.permute.xlu0 %501
      %503 = vrot.lane.b32.xlu0 %v251, 80
      %v504 = vpop.permute.xlu0 %503
      %v506 = vsel %vm254, %v502, 0
      %v509 = vsel %vm254, %v504, 0
      %511 = vmatpush.bf16.xpose.msra.mxu0 0
      %512 = vmatpush.bf16.xpose.msra.mxu0 0
      %513 = vmatpush.bf16.xpose.msra.mxu0 0
      %514 = vmatpush.bf16.xpose.msra.mxu0 0
      %515 = vmatpush.bf16.xpose.msra.mxu0 0
      %516 = vmatpush.bf16.xpose.msra.mxu0 0
      %517 = vmatpush.bf16.xpose.msra.mxu0 0
      %518 = vmatpush.bf16.xpose.msra.mxu0 %v509
      %519 = vmatmul.bf16.gmra.mxu0 %v506
      %v520 = vpop.f32.mrf.mxu0
      %v521 = vadd.f32 0.0, %v520
      %v522 = vpop.f32.mrf.mxu0
      %523 = vdwg.mxu0
      %v524 = vsel %vm274, %v521, -inf
      %525 = vmax.xlane.f32.xlu0 %v524
      %v526 = vpop.xlane.xlu0 %525
      %v527 = vsub.f32 %v521, %v526
      %v528 = vmul.f32 %v527, 1.442695
      %v529 = vpow.pop %v528
      %v530 = vsel %vm274, %v529, 0.0
      %531 = vadd.xlane.f32.xlu0 %v530
      %v532 = vpop.xlane.xlu0 %531
      %v533 = vrcp.pop %v532
      %v534 = vmul.f32 %v529, %v533
      %v535 = vpack.c.bf16 %v534, %v534
      %536 = vrot.lane.b32.xlu0 %v251, 48
      %v537 = vpop.permute.xlu0 %536
      %v539 = vsel %vm274, %v535, 0
      %v542 = vsel %vm292, %v537, 0
      %544 = vmatpush.bf16.msra.mxu0 0
      %545 = vmatpush.bf16.msra.mxu0 0
      %546 = vmatpush.bf16.msra.mxu0 0
      %547 = vmatpush.bf16.msra.mxu0 0
      %548 = vmatpush.bf16.msra.mxu0 0
      %549 = vmatpush.bf16.msra.mxu0 0
      %550 = vmatpush.bf16.msra.mxu0 0
      %551 = vmatpush.bf16.msra.mxu0 %v542
      %552 = vmatmul.bf16.gmra.mxu0 %v539
      %v553 = vpop.f32.mrf.mxu0
      %v554 = vadd.f32 0.0, %v553
      %v555 = vpop.f32.mrf.mxu0
      %556 = vdwg.mxu0
      %v557 = vpack.c.bf16 %v554, %v554
      %559 = vrot.lane.b32.xlu0 %v557, 16
      %v560 = vpop.permute.xlu0 %559
      %vm562 = vcmask 158848
      %563 = vst.msk [vmem:[#allocation3] sm:$0xf] %vm562, %v560
      %564 = vrot.lane.b32.xlu0 %v251, 108
      %v565 = vpop.permute.xlu0 %564
      %566 = vrot.lane.b32.xlu0 %v251, 76
      %v567 = vpop.permute.xlu0 %566
      %v569 = vsel %vm254, %v565, 0
      %v572 = vsel %vm254, %v567, 0
      %574 = vmatpush.bf16.xpose.msra.mxu0 0
      %575 = vmatpush.bf16.xpose.msra.mxu0 0
      %576 = vmatpush.bf16.xpose.msra.mxu0 0
      %577 = vmatpush.bf16.xpose.msra.mxu0 0
      %578 = vmatpush.bf16.xpose.msra.mxu0 0
      %579 = vmatpush.bf16.xpose.msra.mxu0 0
      %580 = vmatpush.bf16.xpose.msra.mxu0 0
      %581 = vmatpush.bf16.xpose.msra.mxu0 %v572
      %582 = vmatmul.bf16.gmra.mxu0 %v569
      %v583 = vpop.f32.mrf.mxu0
      %v584 = vadd.f32 0.0, %v583
      %v585 = vpop.f32.mrf.mxu0
      %586 = vdwg.mxu0
      %v587 = vsel %vm274, %v584, -inf
      %588 = vmax.xlane.f32.xlu0 %v587
      %v589 = vpop.xlane.xlu0 %588
      %v590 = vsub.f32 %v584, %v589
      %v591 = vmul.f32 %v590, 1.442695
      %v592 = vpow.pop %v591
      %v593 = vsel %vm274, %v592, 0.0
      %594 = vadd.xlane.f32.xlu0 %v593
      %v595 = vpop.xlane.xlu0 %594
      %v596 = vrcp.pop %v595
      %v597 = vmul.f32 %v592, %v596
      %v598 = vpack.c.bf16 %v597, %v597
      %599 = vrot.lane.b32.xlu0 %v251, 44
      %v600 = vpop.permute.xlu0 %599
      %v602 = vsel %vm274, %v598, 0
      %v605 = vsel %vm292, %v600, 0
      %607 = vmatpush.bf16.msra.mxu0 0
      %608 = vmatpush.bf16.msra.mxu0 0
      %609 = vmatpush.bf16.msra.mxu0 0
      %610 = vmatpush.bf16.msra.mxu0 0
      %611 = vmatpush.bf16.msra.mxu0 0
      %612 = vmatpush.bf16.msra.mxu0 0
      %613 = vmatpush.bf16.msra.mxu0 0
      %614 = vmatpush.bf16.msra.mxu0 %v605
      %615 = vmatmul.bf16.gmra.mxu0 %v602
      %v616 = vpop.f32.mrf.mxu0
      %v617 = vadd.f32 0.0, %v616
      %v618 = vpop.f32.mrf.mxu0
      %619 = vdwg.mxu0
      %v620 = vpack.c.bf16 %v617, %v617
      %622 = vrot.lane.b32.xlu0 %v620, 20
      %v623 = vpop.permute.xlu0 %622
      %vm625 = vcmask 191648
      %626 = vst.msk [vmem:[#allocation3] sm:$0xf] %vm625, %v623
      %627 = vrot.lane.b32.xlu0 %v251, 104
      %v628 = vpop.permute.xlu0 %627
      %629 = vrot.lane.b32.xlu0 %v251, 72
      %v630 = vpop.permute.xlu0 %629
      %v632 = vsel %vm254, %v628, 0
      %v635 = vsel %vm254, %v630, 0
      %637 = vmatpush.bf16.xpose.msra.mxu0 0
      %638 = vmatpush.bf16.xpose.msra.mxu0 0
      %639 = vmatpush.bf16.xpose.msra.mxu0 0
      %640 = vmatpush.bf16.xpose.msra.mxu0 0
      %641 = vmatpush.bf16.xpose.msra.mxu0 0
      %642 = vmatpush.bf16.xpose.msra.mxu0 0
      %643 = vmatpush.bf16.xpose.msra.mxu0 0
      %644 = vmatpush.bf16.xpose.msra.mxu0 %v635
      %645 = vmatmul.bf16.gmra.mxu0 %v632
      %v646 = vpop.f32.mrf.mxu0
      %v647 = vadd.f32 0.0, %v646
      %v648 = vpop.f32.mrf.mxu0
      %649 = vdwg.mxu0
      %v650 = vsel %vm274, %v647, -inf
      %651 = vmax.xlane.f32.xlu0 %v650
      %v652 = vpop.xlane.xlu0 %651
      %v653 = vsub.f32 %v647, %v652
      %v654 = vmul.f32 %v653, 1.442695
      %v655 = vpow.pop %v654
      %v656 = vsel %vm274, %v655, 0.0
      %657 = vadd.xlane.f32.xlu0 %v656
      %v658 = vpop.xlane.xlu0 %657
      %v659 = vrcp.pop %v658
      %v660 = vmul.f32 %v655, %v659
      %v661 = vpack.c.bf16 %v660, %v660
      %662 = vrot.lane.b32.xlu0 %v251, 40
      %v663 = vpop.permute.xlu0 %662
      %v665 = vsel %vm274, %v661, 0
      %v668 = vsel %vm292, %v663, 0
      %670 = vmatpush.bf16.msra.mxu0 0
      %671 = vmatpush.bf16.msra.mxu0 0
      %672 = vmatpush.bf16.msra.mxu0 0
      %673 = vmatpush.bf16.msra.mxu0 0
      %674 = vmatpush.bf16.msra.mxu0 0
      %675 = vmatpush.bf16.msra.mxu0 0
      %676 = vmatpush.bf16.msra.mxu0 0
      %677 = vmatpush.bf16.msra.mxu0 %v668
      %678 = vmatmul.bf16.gmra.mxu0 %v665
      %v679 = vpop.f32.mrf.mxu0
      %v680 = vadd.f32 0.0, %v679
      %v681 = vpop.f32.mrf.mxu0
      %682 = vdwg.mxu0
      %v683 = vpack.c.bf16 %v680, %v680
      %685 = vrot.lane.b32.xlu0 %v683, 24
      %v686 = vpop.permute.xlu0 %685
      %vm688 = vcmask 224448
      %689 = vst.msk [vmem:[#allocation3] sm:$0xf] %vm688, %v686
      %690 = vrot.lane.b32.xlu0 %v251, 100
      %v691 = vpop.permute.xlu0 %690
      %692 = vrot.lane.b32.xlu0 %v251, 68
      %v693 = vpop.permute.xlu0 %692
      %v695 = vsel %vm254, %v691, 0
      %v698 = vsel %vm254, %v693, 0
      %700 = vmatpush.bf16.xpose.msra.mxu0 0
      %701 = vmatpush.bf16.xpose.msra.mxu0 0
      %702 = vmatpush.bf16.xpose.msra.mxu0 0
      %703 = vmatpush.bf16.xpose.msra.mxu0 0
      %704 = vmatpush.bf16.xpose.msra.mxu0 0
      %705 = vmatpush.bf16.xpose.msra.mxu0 0
      %706 = vmatpush.bf16.xpose.msra.mxu0 0
      %707 = vmatpush.bf16.xpose.msra.mxu0 %v698
      %708 = vmatmul.bf16.gmra.mxu0 %v695
      %v709 = vpop.f32.mrf.mxu0
      %v710 = vadd.f32 0.0, %v709
      %v711 = vpop.f32.mrf.mxu0
      %712 = vdwg.mxu0
      %v713 = vsel %vm274, %v710, -inf
      %714 = vmax.xlane.f32.xlu0 %v713
      %v715 = vpop.xlane.xlu0 %714
      %v716 = vsub.f32 %v710, %v715
      %v717 = vmul.f32 %v716, 1.442695
      %v718 = vpow.pop %v717
      %v719 = vsel %vm274, %v718, 0.0
      %720 = vadd.xlane.f32.xlu0 %v719
      %v721 = vpop.xlane.xlu0 %720
      %v722 = vrcp.pop %v721
      %v723 = vmul.f32 %v718, %v722
      %v724 = vpack.c.bf16 %v723, %v723
      %725 = vrot.lane.b32.xlu0 %v251, 36
      %v726 = vpop.permute.xlu0 %725
      %v728 = vsel %vm274, %v724, 0
      %v731 = vsel %vm292, %v726, 0
      %733 = vmatpush.bf16.msra.mxu0 0
      %734 = vmatpush.bf16.msra.mxu0 0
      %735 = vmatpush.bf16.msra.mxu0 0
      %736 = vmatpush.bf16.msra.mxu0 0
      %737 = vmatpush.bf16.msra.mxu0 0
      %738 = vmatpush.bf16.msra.mxu0 0
      %739 = vmatpush.bf16.msra.mxu0 0
      %740 = vmatpush.bf16.msra.mxu0 %v731
      %741 = vmatmul.bf16.gmra.mxu0 %v728
      %v742 = vpop.f32.mrf.mxu0
      %v743 = vadd.f32 0.0, %v742
      %v744 = vpop.f32.mrf.mxu0
      %745 = vdwg.mxu0
      %v746 = vpack.c.bf16 %v743, %v743
      %748 = vrot.lane.b32.xlu0 %v746, 28
      %v749 = vpop.permute.xlu0 %748
      %vm751 = vcmask 257248
      %752 = vst.msk [vmem:[#allocation3] sm:$0xf] %vm751, %v749
      %v753 = vld [vmem:[#allocation3] sm:$0xf]
      %v758 = vunpack.c.l.b16 %v233
      %v759 = vunpack.c.l.b16 %v234
      %v760 = vunpack.c.l.b16 %v235
      %v761 = vunpack.c.l.b16 %v236
      %v762 = vpack.c.b16 %v759, %v758
      %v763 = vpack.c.b16 %v761, %v760
      %v767 = vsel %vm43, %v753, 0
      %769 = vmatpush.bf16.msra.mxu0 0
      %770 = vmatpush.bf16.msra.mxu0 0
      %771 = vmatpush.bf16.msra.mxu0 0
      %772 = vmatpush.bf16.msra.mxu0 0
      %773 = vmatpush.bf16.msra.mxu0 0
      %774 = vmatpush.bf16.msra.mxu0 0
      %775 = vmatpush.bf16.msra.mxu0 %v763
      %776 = vmatpush.bf16.msra.mxu0 %v762
      %777 = vmatmul.bf16.gmra.mxu0 %v767
      %v778 = vpop.f32.mrf.mxu0
      %v779 = vadd.f32 0.0, %v778
      %v780 = vpop.f32.mrf.mxu0
      %781 = vdwg.mxu0
      %s782 = scalar_lea.vmem [#allocation4], %s243
      %v783 = vld [vmem:[%s782] sm:$0xff]
      %v784 = vadd.f32 %v783, %v779
      %v785 = vperm.slane %v37, 3
      %v786 = vadd.f32 %v784, %v785
      %787 = vst.msk [vmem:[%s782] sm:$0xff] %vm43, %v786
    $region46: #{multihead_attention_bridge.1} parent=1 // loop_footer
      %s242 = sadd.s32 1, %s238
    $region47: #{multihead_attention_bridge.1} parent=1 // loop_footer_branch
      %237 = sbr.rel target = $region43
    $region48: #{multihead_attention_bridge.1} parent=1 // loop_exit
      _
    %v788 = vld [vmem:[#allocation4] sm:$0xff]
    %v789 = vld [vmem:[#allocation4 + $0x8] sm:$0xff]
    %v790 = vsel %vm43, %v788, 0.0
    %791 = vadd.xlane.f32.xlu0 %v790
    %v792 = vpop.xlane.xlu0 %791
    %v793 = vsel %vm43, %v789, 0.0
    %794 = vadd.xlane.f32.xlu0 %v793
    %v795 = vpop.xlane.xlu0 %794
    %v796 = vmul.f32 %v792, %v56
    %v797 = vmul.f32 %v795, %v56
    %v798 = vsub.f32 %v788, %v796
    %v799 = vsub.f32 %v789, %v797
    %v800 = vmul.f32 %v798, %v798
    %v801 = vmul.f32 %v799, %v799
    %v802 = vsel %vm43, %v800, 0.0
    %803 = vadd.xlane.f32.xlu0 %v802
    %v804 = vpop.xlane.xlu0 %803
    %v805 = vsel %vm43, %v801, 0.0
    %806 = vadd.xlane.f32.xlu0 %v805
    %v807 = vpop.xlane.xlu0 %806
    %v808 = vmul.f32 %v804, %v56
    %v809 = vmul.f32 %v807, %v56
    %v810 = vadd.f32 %v808, 1e-05
    %v811 = vadd.f32 %v809, 1e-05
    %v812 = vrsqrt.pop %v810
    %v813 = vmul.f32 %v812, %v810
    %v814 = vmul.f32 %v813, %v812
    %v815 = vmul.f32 0.5, %v814
    %v816 = vsub.f32 1.5, %v815
    %v817 = vmul.f32 %v812, %v816
    %vm818 = vweird.f32 %v810
    %vm819 = vweird.f32 %v812
    %vm820 = vmor %vm818, %vm819
    %v821 = vsel %vm820, %v812, %v817
    %v822 = vrsqrt.pop %v811
    %v823 = vmul.f32 %v822, %v811
    %v824 = vmul.f32 %v823, %v822
    %v825 = vmul.f32 0.5, %v824
    %v826 = vsub.f32 1.5, %v825
    %v827 = vmul.f32 %v822, %v826
    %vm828 = vweird.f32 %v811
    %vm829 = vweird.f32 %v822
    %vm830 = vmor %vm828, %vm829
    %v831 = vsel %vm830, %v822, %v827
    %v832 = vmul.f32 %v798, %v821
    %v833 = vmul.f32 %v799, %v831
    %v834 = vperm.slane %v37, 4
    %v835 = vmul.f32 %v832, %v834
    %v836 = vmul.f32 %v833, %v834
    %v837 = vperm.slane %v37, 5
    %v838 = vadd.f32 %v835, %v837
    %v839 = vadd.f32 %v836, %v837
    %v840 = vld [vmem:[%s7] sm:$0xf]
    %v841 = vld [vmem:[%s7 + $0x4] sm:$0xf]
    %v842 = vld [vmem:[%s7 + $0x8] sm:$0xf]
    %v843 = vld [vmem:[%s7 + $0xc] sm:$0xf]
    %v844 = vpack.c.bf16 %v839, %v838
    %v845 = vld [vmem:[%s8] sm:$0x1]
    %v847 = vperm.slane %v845, 0
    %v853 = vunpack.c.l.b16 %v840
    %v854 = vunpack.c.l.b16 %v841
    %v855 = vunpack.c.l.b16 %v842
    %v856 = vunpack.c.l.b16 %v843
    %v857 = vpack.c.b16 %v854, %v853
    %v858 = vpack.c.b16 %v856, %v855
    %v862 = vsel %vm43, %v844, 0
    %864 = vmatpush.bf16.msra.mxu0 0
    %865 = vmatpush.bf16.msra.mxu0 0
    %866 = vmatpush.bf16.msra.mxu0 0
    %867 = vmatpush.bf16.msra.mxu0 0
    %868 = vmatpush.bf16.msra.mxu0 0
    %869 = vmatpush.bf16.msra.mxu0 0
    %870 = vmatpush.bf16.msra.mxu0 %v858
    %871 = vmatpush.bf16.msra.mxu0 %v857
    %872 = vmatmul.bf16.gmra.mxu0 %v862
    %v873 = vpop.f32.mrf.mxu0
    %v874 = vadd.f32 %v847, %v873
    %v875 = vpop.f32.mrf.mxu0
    %v876 = vadd.f32 %v847, %v875
    %877 = vdwg.mxu0
    %v878 = vmul.f32 %v874, 0.5
    %v879 = vmul.f32 %v876, 0.5
    %v880 = vmul.f32 %v874, 0.70710677
    %v881 = vmul.f32 %v876, 0.70710677
    %v882 = vmul.f32 %v880, %v880
    %v883 = vmin.f32 16.0, %v882
    %v884 = vmul.f32 %v883, 2.1237322e-06
    %v885 = vadd.f32 %v884, 0.00028619796
    %v886 = vmul.f32 %v883, %v885
    %v887 = vadd.f32 %v886, 0.0036580483
    %v888 = vmul.f32 %v883, %v887
    %v889 = vadd.f32 %v888, 0.05243302
    %v890 = vmul.f32 %v883, %v889
    %v891 = vadd.f32 %v890, 0.18741608
    %v892 = vmul.f32 %v883, %v891
    %v893 = vadd.f32 %v892, 1.1283791
    %v894 = vmul.f32 %v880, %v893
    %v895 = vmul.f32 %v883, 3.8918573e-05
    %v896 = vadd.f32 %v895, 0.001143296
    %v897 = vmul.f32 %v883, %v896
    %v898 = vadd.f32 %v897, 0.014752088
    %v899 = vmul.f32 %v883, %v898
    %v900 = vadd.f32 %v899, 0.112945676
    %v901 = vmul.f32 %v883, %v900
    %v902 = vadd.f32 %v901, 0.4994258
    %v903 = vmul.f32 %v883, %v902
    %v904 = vadd.f32 %v903, 1.0
    %v905 = vrcp.pop %v904
    %v906 = vmul.f32 %v904, %v905
    %v907 = vsub.f32 1.0, %v906
    %v908 = vmul.f32 %v905, %v907
    %v909 = vadd.f32 %v905, %v908
    %vm910 = vweird.f32 %v904
    %vm911 = vweird.f32 %v905
    %vm912 = vmor %vm910, %vm911
    %v913 = vsel %vm912, %v905, %v909
    %v914 = vand.u32 2147483647, %v904
    %vm915 = vcmp.eq.f32.partialorder %v914, 8.507059e+37
    %v916 = vand.u32 %v904, 2147483648
    %v917 = vor.u32 1.1754944e-38, %v916
    %v918 = vsel %vm915, %v917, %v913
    %v919 = vmul.f32 %v894, %v918
    %v920 = vmin.f32 %v919, 1.0
    %v921 = vmax.f32 %v920, -1.0
    %v922 = vmul.f32 %v881, %v881
    %v923 = vmin.f32 16.0, %v922
    %v924 = vmul.f32 %v923, 2.1237322e-06
    %v925 = vadd.f32 %v924, 0.00028619796
    %v926 = vmul.f32 %v923, %v925
    %v927 = vadd.f32 %v926, 0.0036580483
    %v928 = vmul.f32 %v923, %v927
    %v929 = vadd.f32 %v928, 0.05243302
    %v930 = vmul.f32 %v923, %v929
    %v931 = vadd.f32 %v930, 0.18741608
    %v932 = vmul.f32 %v923, %v931
    %v933 = vadd.f32 %v932, 1.1283791
    %v934 = vmul.f32 %v881, %v933
    %v935 = vmul.f32 %v923, 3.8918573e-05
    %v936 = vadd.f32 %v935, 0.001143296
    %v937 = vmul.f32 %v923, %v936
    %v938 = vadd.f32 %v937, 0.014752088
    %v939 = vmul.f32 %v923, %v938
    %v940 = vadd.f32 %v939, 0.112945676
    %v941 = vmul.f32 %v923, %v940
    %v942 = vadd.f32 %v941, 0.4994258
    %v943 = vmul.f32 %v923, %v942
    %v944 = vadd.f32 %v943, 1.0
    %v945 = vrcp.pop %v944
    %v946 = vmul.f32 %v944, %v945
    %v947 = vsub.f32 1.0, %v946
    %v948 = vmul.f32 %v945, %v947
    %v949 = vadd.f32 %v945, %v948
    %vm950 = vweird.f32 %v944
    %vm951 = vweird.f32 %v945
    %vm952 = vmor %vm950, %vm951
    %v953 = vsel %vm952, %v945, %v949
    %v954 = vand.u32 2147483647, %v944
    %vm955 = vcmp.eq.f32.partialorder %v954, 8.507059e+37
    %v956 = vand.u32 %v944, 2147483648
    %v957 = vor.u32 1.1754944e-38, %v956
    %v958 = vsel %vm955, %v957, %v953
    %v959 = vmul.f32 %v934, %v958
    %v960 = vmin.f32 %v959, 1.0
    %v961 = vmax.f32 %v960, -1.0
    %v962 = vadd.f32 %v921, 1.0
    %v963 = vadd.f32 %v961, 1.0
    %v964 = vmul.f32 %v878, %v962
    %v965 = vmul.f32 %v879, %v963
    %v966 = vld [vmem:[%s9] sm:$0xf]
    %v967 = vld [vmem:[%s9 + $0x4] sm:$0xf]
    %v968 = vld [vmem:[%s9 + $0x8] sm:$0xf]
    %v969 = vld [vmem:[%s9 + $0xc] sm:$0xf]
    %v970 = vld [vmem:[%s9 + $0x10] sm:$0xf]
    %v971 = vld [vmem:[%s9 + $0x14] sm:$0xf]
    %v972 = vld [vmem:[%s9 + $0x18] sm:$0xf]
    %v973 = vld [vmem:[%s9 + $0x1c] sm:$0xf]
    %v974 = vpack.c.bf16 %v965, %v964
    %v983 = vunpack.c.l.b16 %v966
    %v984 = vunpack.c.l.b16 %v967
    %v985 = vunpack.c.l.b16 %v968
    %v986 = vunpack.c.l.b16 %v969
    %v987 = vunpack.c.l.b16 %v970
    %v988 = vunpack.c.l.b16 %v971
    %v989 = vunpack.c.l.b16 %v972
    %v990 = vunpack.c.l.b16 %v973
    %v991 = vpack.c.b16 %v984, %v983
    %v992 = vpack.c.b16 %v986, %v985
    %v993 = vpack.c.b16 %v988, %v987
    %v994 = vpack.c.b16 %v990, %v989
    %vm999 = vcmask 523264
    %v1001 = vsel %vm999, %v974, 0
    %1003 = vmatpush.bf16.msra.mxu0 0
    %1004 = vmatpush.bf16.msra.mxu0 0
    %1005 = vmatpush.bf16.msra.mxu0 0
    %1006 = vmatpush.bf16.msra.mxu0 0
    %1007 = vmatpush.bf16.msra.mxu0 %v994
    %1008 = vmatpush.bf16.msra.mxu0 %v993
    %1009 = vmatpush.bf16.msra.mxu0 %v992
    %1010 = vmatpush.bf16.msra.mxu0 %v991
    %1011 = vmatmul.bf16.gmra.mxu0 %v1001
    %v1012 = vpop.f32.mrf.mxu0
    %v1013 = vadd.f32 0.0, %v1012
    %v1014 = vpop.f32.mrf.mxu0
    %v1015 = vadd.f32 0.0, %v1014
    %1016 = vdwg.mxu0
    %v1017 = vadd.f32 %v788, %v1013
    %v1018 = vadd.f32 %v789, %v1015
    %v1019 = vperm.slane %v37, 6
    %v1020 = vadd.f32 %v1017, %v1019
    %v1021 = vadd.f32 %v1018, %v1019
    %v1022 = vld [vmem:[#allocation5] sm:$0xff]
    %v1023 = vld [vmem:[#allocation5 + $0x8] sm:$0xff]
    %v1024 = vperm.slane %v38, 1
    %v1025 = vmul.f32 %v1024, %v1022
    %v1026 = vmul.f32 %v1024, %v1023
    %v1027 = vadd.f32 %v1020, %v1025
    %v1028 = vadd.f32 %v1021, %v1026
    %v1029 = vsel %vm43, %v1027, 0.0
    %1030 = vadd.xlane.f32.xlu0 %v1029
    %v1031 = vpop.xlane.xlu0 %1030
    %v1032 = vsel %vm43, %v1028, 0.0
    %1033 = vadd.xlane.f32.xlu0 %v1032
    %v1034 = vpop.xlane.xlu0 %1033
    %v1035 = vmul.f32 %v1031, %v56
    %v1036 = vmul.f32 %v1034, %v56
    %v1037 = vsub.f32 %v1027, %v1035
    %v1038 = vsub.f32 %v1028, %v1036
    %v1039 = vmul.f32 %v1037, %v1037
    %v1040 = vmul.f32 %v1038, %v1038
    %v1041 = vsel %vm43, %v1039, 0.0
    %1042 = vadd.xlane.f32.xlu0 %v1041
    %v1043 = vpop.xlane.xlu0 %1042
    %v1044 = vsel %vm43, %v1040, 0.0
    %1045 = vadd.xlane.f32.xlu0 %v1044
    %v1046 = vpop.xlane.xlu0 %1045
    %v1047 = vmul.f32 %v1043, %v56
    %v1048 = vmul.f32 %v1046, %v56
    %v1049 = vadd.f32 %v1047, 1e-05
    %v1050 = vadd.f32 %v1048, 1e-05
    %v1051 = vrsqrt.pop %v1049
    %v1052 = vmul.f32 %v1051, %v1049
    %v1053 = vmul.f32 %v1052, %v1051
    %v1054 = vmul.f32 0.5, %v1053
    %v1055 = vsub.f32 1.5, %v1054
    %v1056 = vmul.f32 %v1051, %v1055
    %vm1057 = vweird.f32 %v1049
    %vm1058 = vweird.f32 %v1051
    %vm1059 = vmor %vm1057, %vm1058
    %v1060 = vsel %vm1059, %v1051, %v1056
    %v1061 = vrsqrt.pop %v1050
    %v1062 = vmul.f32 %v1061, %v1050
    %v1063 = vmul.f32 %v1062, %v1061
    %v1064 = vmul.f32 0.5, %v1063
    %v1065 = vsub.f32 1.5, %v1064
    %v1066 = vmul.f32 %v1061, %v1065
    %vm1067 = vweird.f32 %v1050
    %vm1068 = vweird.f32 %v1061
    %vm1069 = vmor %vm1067, %vm1068
    %v1070 = vsel %vm1069, %v1061, %v1066
    %v1071 = vmul.f32 %v1037, %v1060
    %v1072 = vmul.f32 %v1038, %v1070
    %v1073 = vperm.slane %v37, 7
    %v1074 = vmul.f32 %v1071, %v1073
    %v1075 = vmul.f32 %v1072, %v1073
    %v1076 = vperm.slane %v38, 0
    %v1077 = vadd.f32 %v1074, %v1076
    %v1078 = vadd.f32 %v1075, %v1076
    %1079 = vst.msk [vmem:[#allocation6] sm:$0xff] %vm43, %v1077
    %1080 = vst.msk [vmem:[#allocation6 + $0x8] sm:$0xff] %vm43, %v1078
    // Predicated region
    $region49: #{multihead_attention_bridge.1} parent=1 // pred_check
      _
    $region50: #{multihead_attention_bridge.1} parent=1 // pred_check_branch
      %1082 = sbr.rel (0) target = $region52
    $region51: #{multihead_attention_bridge.1} parent=1 // pred_region
      %1084 = vsyncadd [#allocation7], 0
      %s1085 = sshll.u32 [#allocation6], 4
      %s1086 = int_to_ptr.vmem [resolvable:$true] %s1085
      %s1087 = sshll.u32 %s10, 4
      %s1088 = int_to_ptr.hbm [resolvable:$true] %s1087
      %1093 = dma.vmem_to_hbm [thread:$0]  %s1086, 256, %s1088, [#allocation7], 128, 128, 8
    $region52: #{multihead_attention_bridge.1} parent=1 // pred_fallthru
      _
    // Predicated region
    $region53: #{multihead_attention_bridge.1} parent=1 // pred_check
      _
    $region54: #{multihead_attention_bridge.1} parent=1 // pred_check_branch
      %1095 = sbr.rel (0) target = $region56
    $region55: #{multihead_attention_bridge.1} parent=1 // pred_region
      %1097 = dma.done [#allocation7], 256
    $region56: #{multihead_attention_bridge.1} parent=1 // pred_fallthru
      _
    %1098 = vsyncpa [#allocation7], 1

</llo_original>
